<compile_context>
chip_gen: v7x
topology: tpu7x:2x2x1
jax: 0.10.0
libtpu: 0.0.40
codegen_flags: <defaults>
</compile_context>

<pallas_src>
import jax
import jax.numpy as jnp
from jax.experimental import pallas as pl
from jax.experimental.pallas import tpu as pltpu


def _cam_head_kernel(x_ref, w_ref, o_ref):
    """relu(W @ X[n]) for both images of the (image, flipped-image) pair."""
    w = w_ref[...]                                                    # [Kp, C]  bf16
    cam0 = jnp.dot(w, x_ref[0], preferred_element_type=jnp.float32)   # [Kp, tn] f32
    cam1 = jnp.dot(w, x_ref[1], preferred_element_type=jnp.float32)
    o_ref[0] = jnp.maximum(cam0, 0.0)
    o_ref[1] = jnp.maximum(cam1, 0.0)


def _pick_spatial_tile(hw, max_tile=512):
    """Whole HW if it fits; otherwise the largest multiple-of-128 divisor <= max_tile."""
    if hw <= max_tile:
        return hw
    for t in range(max_tile, 127, -128):
        if hw % t == 0:
            return t
    return hw  # no lane-friendly divisor: fall back to one big tile


def cam_head(features, classifier_weight):
    """CAM.forward head.

    features          : [2, C, H, W] float32 (stage4 output, NCHW)
    classifier_weight : [K, C, 1, 1] float32 (nn.Conv2d(C, K, 1, bias=False).weight)
    returns           : [K, H, W] float32 == (relu(conv(feat))[0]
                                              + relu(conv(feat))[1].flip(-1))
    """
    n, c, h, w = features.shape
    assert n == 2, "CAM forward expects an (image, flipped-image) pair on the batch axis"
    k_cls = classifier_weight.shape[0]
    hw = h * w

    # Free layout ops only: NCHW -> [2, C, HW] reshape and [K, C, 1, 1] -> [K, C] reshape.
    x = features.reshape(n, c, hw).astype(jnp.bfloat16)
    wt = classifier_weight.reshape(k_cls, c).astype(jnp.bfloat16)
    kp = ((k_cls + 31) // 32) * 32                       # small sublane-axis padding
    wt = jnp.pad(wt, ((0, kp - k_cls), (0, 0)))          # [Kp, C]

    tn = _pick_spatial_tile(hw)
    n_tiles = hw // tn

    out = pl.pallas_call(
        _cam_head_kernel,
        out_shape=jax.ShapeDtypeStruct((2, kp, hw), jnp.float32),
        grid=(n_tiles,),
        in_specs=[
            pl.BlockSpec((2, c, tn), lambda i: (0, 0, i)),   # both images' features
            pl.BlockSpec((kp, c), lambda i: (0, 0)),         # classifier weight
        ],
        out_specs=pl.BlockSpec((2, kp, tn), lambda i: (0, 0, i)),
        compiler_params=pltpu.CompilerParams(
            dimension_semantics=("parallel",),
        ),
    )(x, wt)

    # The flip commutes with the 1x1 conv, so apply it to the tiny [K, H, W] output
    # (a few KiB) instead of pre-flipping the large input feature slab.
    cam0 = out[0, :k_cls].reshape(k_cls, h, w)
    cam1 = out[1, :k_cls].reshape(k_cls, h, w)
    return cam0 + cam1[:, :, ::-1]


if __name__ == "__main__":
    key = jax.random.PRNGKey(0)
    k_feat, k_w = jax.random.split(key)

    # Module-implied shapes: classifier is Conv2d(2048, 20, 1, bias=False); batch must
    # be 2 (image + flipped image). Spatial kept small for the demo.
    N, C, H, W = 2, 2048, 8, 8
    K = 20

    features = jax.random.normal(k_feat, (N, C, H, W), dtype=jnp.float32)
    # deterministic kaiming-style init for the 1x1 classifier weight
    classifier_weight = (
        jax.random.normal(k_w, (K, C, 1, 1), dtype=jnp.float32) * (2.0 / C) ** 0.5
    )

    cam = jax.block_until_ready(cam_head(features, classifier_weight))
    assert cam.shape == (K, H, W) and cam.dtype == jnp.float32

    # pure-JAX f32 reference of the same head (kernel uses bf16 inputs, f32 accumulation)
    logits = jnp.einsum("nchw,kc->nkhw", features, classifier_weight.reshape(K, C))
    relu = jnp.maximum(logits, 0.0)
    ref = relu[0] + relu[1][:, :, ::-1]
    assert jnp.allclose(cam, ref, rtol=5e-2, atol=5e-2), "mismatch vs reference"

    print("KERNEL_OK")
</pallas_src>

<mosaic_0001>
module attributes {stable_mosaic.version = 11 : i64} {
  func.func @_cam_head_kernel(%arg0: i32, %arg1: memref<2x2048x64xbf16, #tpu.memory_space<vmem>>, %arg2: memref<32x2048xbf16, #tpu.memory_space<vmem>>, %arg3: memref<2x32x64xf32, #tpu.memory_space<vmem>>) attributes {dimension_semantics = [#tpu.dimension_semantics<parallel>], iteration_bounds = array<i64: 1>, scalar_prefetch = 0 : i64, scratch_operands = 0 : i64, tpu.core_type = #tpu.core_type<tc>, window_params = [{transform_indices = @transform_0, window_bounds = array<i64: 2, 2048, 64>}, {pipeline_mode = #tpu.pipeline_mode<synchronous>, transform_indices = @transform_1, window_bounds = array<i64: 32, 2048>}, {transform_indices = @transform_2, window_bounds = array<i64: 2, 32, 64>}]} {
    %c0 = arith.constant 0 : index
    %c0_0 = arith.constant 0 : index
    %0 = vector.load %arg2[%c0, %c0_0] : memref<32x2048xbf16, #tpu.memory_space<vmem>>, vector<32x2048xbf16>
    %c0_1 = arith.constant 0 : index
    %c0_2 = arith.constant 0 : index
    %c0_3 = arith.constant 0 : index
    %1 = vector.load %arg1[%c0_1, %c0_2, %c0_3] : memref<2x2048x64xbf16, #tpu.memory_space<vmem>>, vector<1x2048x64xbf16>
    %2 = vector.shape_cast %1 : vector<1x2048x64xbf16> to vector<2048x64xbf16>
    %cst = arith.constant dense<0.000000e+00> : vector<32x64xf32>
    %3 = tpu.matmul %0, %2, %cst {dimension_numbers = #tpu.dot_dimension_numbers<[1], [0], [0], [1], [0, 0, 1, 1], [], []>} : vector<32x2048xbf16>, vector<2048x64xbf16>, vector<32x64xf32> -> vector<32x64xf32>
    %c1 = arith.constant 1 : index
    %c0_4 = arith.constant 0 : index
    %c0_5 = arith.constant 0 : index
    %4 = vector.load %arg1[%c1, %c0_4, %c0_5] : memref<2x2048x64xbf16, #tpu.memory_space<vmem>>, vector<1x2048x64xbf16>
    %5 = vector.shape_cast %4 : vector<1x2048x64xbf16> to vector<2048x64xbf16>
    %cst_6 = arith.constant dense<0.000000e+00> : vector<32x64xf32>
    %6 = tpu.matmul %0, %5, %cst_6 {dimension_numbers = #tpu.dot_dimension_numbers<[1], [0], [0], [1], [0, 0, 1, 1], [], []>} : vector<32x2048xbf16>, vector<2048x64xbf16>, vector<32x64xf32> -> vector<32x64xf32>
    %cst_7 = arith.constant 0.000000e+00 : f32
    %7 = vector.broadcast %cst_7 : f32 to vector<32x64xf32>
    %8 = arith.maximumf %3, %7 : vector<32x64xf32>
    %c0_8 = arith.constant 0 : index
    %c0_9 = arith.constant 0 : index
    %c0_10 = arith.constant 0 : index
    %9 = vector.load %arg3[%c0_8, %c0_9, %c0_10] : memref<2x32x64xf32, #tpu.memory_space<vmem>>, vector<1x32x64xf32>
    %10 = vector.shape_cast %9 : vector<1x32x64xf32> to vector<32x64xf32>
    %11 = vector.shape_cast %8 : vector<32x64xf32> to vector<1x32x64xf32>
    tpu.vector_store %arg3[%c0_8, %c0_9, %c0_10], %11 {strides = array<i32>} : memref<2x32x64xf32, #tpu.memory_space<vmem>>, vector<1x32x64xf32>,
    %cst_11 = arith.constant 0.000000e+00 : f32
    %12 = vector.broadcast %cst_11 : f32 to vector<32x64xf32>
    %13 = arith.maximumf %6, %12 : vector<32x64xf32>
    %c1_12 = arith.constant 1 : index
    %c0_13 = arith.constant 0 : index
    %c0_14 = arith.constant 0 : index
    %14 = vector.load %arg3[%c1_12, %c0_13, %c0_14] : memref<2x32x64xf32, #tpu.memory_space<vmem>>, vector<1x32x64xf32>
    %15 = vector.shape_cast %14 : vector<1x32x64xf32> to vector<32x64xf32>
    %16 = vector.shape_cast %13 : vector<32x64xf32> to vector<1x32x64xf32>
    tpu.vector_store %arg3[%c1_12, %c0_13, %c0_14], %16 {strides = array<i32>} : memref<2x32x64xf32, #tpu.memory_space<vmem>>, vector<1x32x64xf32>,
    return
  }
  func.func @transform_0(%arg0: i32) -> (i32, i32, i32) {
    %c0_i32 = arith.constant 0 : i32
    %c0_i32_0 = arith.constant 0 : i32
    %c0_i32_1 = arith.constant 0 : i32
    return %c0_i32, %c0_i32_0, %arg0 : i32, i32, i32
  }
  func.func @transform_1(%arg0: i32) -> (i32, i32) {
    %c0_i32 = arith.constant 0 : i32
    %c0_i32_0 = arith.constant 0 : i32
    %c0_i32_1 = arith.constant 0 : i32
    return %c0_i32, %c0_i32_0 : i32, i32
  }
  func.func @transform_2(%arg0: i32) -> (i32, i32, i32) {
    %c0_i32 = arith.constant 0 : i32
    %c0_i32_0 = arith.constant 0 : i32
    %c0_i32_1 = arith.constant 0 : i32
    return %c0_i32, %c0_i32_0, %arg0 : i32, i32, i32
  }
}

</mosaic_0001>

<llo_original>
// kernel: tpu_custom_call.1
$region0: #{tpu_custom_call.1}
  #allocation0 [shape = 'u32[]', space=smem, size = 0x4, offset = 0x4, fixed_abs, tag = 'smem constant byte address 0x4 - core index']
  #allocation1 [shape = 'u32[144,128]{1,0:T(1,128)}', space=vmem, size = 0x12000, scoped, tag = 'internal scratch']
  %s0 = inlined_call_operand.vmem [shape: bf16[2,2048,64], index: 0, kind: input, shape index: {}]
  %s1 = inlined_call_operand.vmem [shape: bf16[32,2048], index: 1, kind: input, shape index: {}]
  %s2 = inlined_call_operand.hbm [shape: f32[2,32,64], index: 2, kind: output, shape index: {}]
  %s3 = sld [smem:[#allocation0]]
  $region18: #{tpu_custom_call.1} parent=0
    _
  %s5 = ssub.s32 1, %s3
  %s6 = scalar_select 0, %s5, %s3
  $region1: #{tpu_custom_call.1} parent=0
    #allocation2 [shape = 'u8[32768]{0}', space=vmem, size = 0x8000, scoped, tag = 'output window, operand 0, single buffered']
    #allocation3 [shape = 's32[1]{0}', space=sflag, size = 0x4, scoped, tag = 'scoped memory for tpu_custom_call.1']
    %7 = vsyncpa [#allocation3], 0
    // Predicated region
    $region2: #{tpu_custom_call.1} parent=1 // pred_check
      _
    $region3: #{tpu_custom_call.1} parent=1 // pred_check_branch
      %9 = sbr.rel (0) target = $region5
    $region4: #{tpu_custom_call.1} parent=1 // pred_region
      _
    $region5: #{tpu_custom_call.1} parent=1 // pred_fallthru
      _
    // Predicated region
    $region6: #{tpu_custom_call.1} parent=1 // pred_check
      _
    $region7: #{tpu_custom_call.1} parent=1 // pred_check_branch
      %11 = sbr.rel (0) target = $region9
    $region8: #{tpu_custom_call.1} parent=1 // pred_region
      _
    $region9: #{tpu_custom_call.1} parent=1 // pred_fallthru
      _
    %v13 = vld [vmem:[%s1] sm:$0xff]
    %v14 = vld [vmem:[%s1 + $0x8] sm:$0xff]
    %v15 = vld [vmem:[%s1 + $0x10] sm:$0xff]
    %v16 = vld [vmem:[%s1 + $0x18] sm:$0xff]
    %v17 = vld [vmem:[%s1 + $0x20] sm:$0xff]
    %v18 = vld [vmem:[%s1 + $0x28] sm:$0xff]
    %v19 = vld [vmem:[%s1 + $0x30] sm:$0xff]
    %v20 = vld [vmem:[%s1 + $0x38] sm:$0xff]
    %v21 = vld [vmem:[%s1 + $0x40] sm:$0xff]
    %v22 = vld [vmem:[%s1 + $0x48] sm:$0xff]
    %v23 = vld [vmem:[%s1 + $0x50] sm:$0xff]
    %v24 = vld [vmem:[%s1 + $0x58] sm:$0xff]
    %v25 = vld [vmem:[%s1 + $0x60] sm:$0xff]
    %v26 = vld [vmem:[%s1 + $0x68] sm:$0xff]
    %v27 = vld [vmem:[%s1 + $0x70] sm:$0xff]
    %v28 = vld [vmem:[%s1 + $0x78] sm:$0xff]
    %v29 = vld [vmem:[%s1 + $0x80] sm:$0xff]
    %v30 = vld [vmem:[%s1 + $0x88] sm:$0xff]
    %v31 = vld [vmem:[%s1 + $0x90] sm:$0xff]
    %v32 = vld [vmem:[%s1 + $0x98] sm:$0xff]
    %v33 = vld [vmem:[%s1 + $0xa0] sm:$0xff]
    %v34 = vld [vmem:[%s1 + $0xa8] sm:$0xff]
    %v35 = vld [vmem:[%s1 + $0xb0] sm:$0xff]
    %v36 = vld [vmem:[%s1 + $0xb8] sm:$0xff]
    %v37 = vld [vmem:[%s1 + $0xc0] sm:$0xff]
    %v38 = vld [vmem:[%s1 + $0xc8] sm:$0xff]
    %v39 = vld [vmem:[%s1 + $0xd0] sm:$0xff]
    %v40 = vld [vmem:[%s1 + $0xd8] sm:$0xff]
    %v41 = vld [vmem:[%s1 + $0xe0] sm:$0xff]
    %v42 = vld [vmem:[%s1 + $0xe8] sm:$0xff]
    %v43 = vld [vmem:[%s1 + $0xf0] sm:$0xff]
    %v44 = vld [vmem:[%s1 + $0xf8] sm:$0xff]
    %v45 = vld [vmem:[%s0] sm:$0xf]
    %v46 = vld [vmem:[%s0 + $0x4] sm:$0xf]
    %v47 = vld [vmem:[%s0 + $0x8] sm:$0xf]
    %v48 = vld [vmem:[%s0 + $0xc] sm:$0xf]
    %v49 = vld [vmem:[%s0 + $0x10] sm:$0xf]
    %v50 = vld [vmem:[%s0 + $0x14] sm:$0xf]
    %v51 = vld [vmem:[%s0 + $0x18] sm:$0xf]
    %v52 = vld [vmem:[%s0 + $0x1c] sm:$0xf]
    %v53 = vld [vmem:[%s0 + $0x20] sm:$0xf]
    %v54 = vld [vmem:[%s0 + $0x24] sm:$0xf]
    %v55 = vld [vmem:[%s0 + $0x28] sm:$0xf]
    %v56 = vld [vmem:[%s0 + $0x2c] sm:$0xf]
    %v57 = vld [vmem:[%s0 + $0x30] sm:$0xf]
    %v58 = vld [vmem:[%s0 + $0x34] sm:$0xf]
    %v59 = vld [vmem:[%s0 + $0x38] sm:$0xf]
    %v60 = vld [vmem:[%s0 + $0x3c] sm:$0xf]
    %v61 = vld [vmem:[%s0 + $0x40] sm:$0xf]
    %v62 = vld [vmem:[%s0 + $0x44] sm:$0xf]
    %v63 = vld [vmem:[%s0 + $0x48] sm:$0xf]
    %v64 = vld [vmem:[%s0 + $0x4c] sm:$0xf]
    %v65 = vld [vmem:[%s0 + $0x50] sm:$0xf]
    %v66 = vld [vmem:[%s0 + $0x54] sm:$0xf]
    %v67 = vld [vmem:[%s0 + $0x58] sm:$0xf]
    %v68 = vld [vmem:[%s0 + $0x5c] sm:$0xf]
    %v69 = vld [vmem:[%s0 + $0x60] sm:$0xf]
    %v70 = vld [vmem:[%s0 + $0x64] sm:$0xf]
    %v71 = vld [vmem:[%s0 + $0x68] sm:$0xf]
    %v72 = vld [vmem:[%s0 + $0x6c] sm:$0xf]
    %v73 = vld [vmem:[%s0 + $0x70] sm:$0xf]
    %v74 = vld [vmem:[%s0 + $0x74] sm:$0xf]
    %v75 = vld [vmem:[%s0 + $0x78] sm:$0xf]
    %v76 = vld [vmem:[%s0 + $0x7c] sm:$0xf]
    %v77 = vld [vmem:[%s0 + $0x80] sm:$0xf]
    %v78 = vld [vmem:[%s0 + $0x84] sm:$0xf]
    %v79 = vld [vmem:[%s0 + $0x88] sm:$0xf]
    %v80 = vld [vmem:[%s0 + $0x8c] sm:$0xf]
    %v81 = vld [vmem:[%s0 + $0x90] sm:$0xf]
    %v82 = vld [vmem:[%s0 + $0x94] sm:$0xf]
    %v83 = vld [vmem:[%s0 + $0x98] sm:$0xf]
    %v84 = vld [vmem:[%s0 + $0x9c] sm:$0xf]
    %v85 = vld [vmem:[%s0 + $0xa0] sm:$0xf]
    %v86 = vld [vmem:[%s0 + $0xa4] sm:$0xf]
    %v87 = vld [vmem:[%s0 + $0xa8] sm:$0xf]
    %v88 = vld [vmem:[%s0 + $0xac] sm:$0xf]
    %v89 = vld [vmem:[%s0 + $0xb0] sm:$0xf]
    %v90 = vld [vmem:[%s0 + $0xb4] sm:$0xf]
    %v91 = vld [vmem:[%s0 + $0xb8] sm:$0xf]
    %v92 = vld [vmem:[%s0 + $0xbc] sm:$0xf]
    %v93 = vld [vmem:[%s0 + $0xc0] sm:$0xf]
    %v94 = vld [vmem:[%s0 + $0xc4] sm:$0xf]
    %v95 = vld [vmem:[%s0 + $0xc8] sm:$0xf]
    %v96 = vld [vmem:[%s0 + $0xcc] sm:$0xf]
    %v97 = vld [vmem:[%s0 + $0xd0] sm:$0xf]
    %v98 = vld [vmem:[%s0 + $0xd4] sm:$0xf]
    %v99 = vld [vmem:[%s0 + $0xd8] sm:$0xf]
    %v100 = vld [vmem:[%s0 + $0xdc] sm:$0xf]
    %v101 = vld [vmem:[%s0 + $0xe0] sm:$0xf]
    %v102 = vld [vmem:[%s0 + $0xe4] sm:$0xf]
    %v103 = vld [vmem:[%s0 + $0xe8] sm:$0xf]
    %v104 = vld [vmem:[%s0 + $0xec] sm:$0xf]
    %v105 = vld [vmem:[%s0 + $0xf0] sm:$0xf]
    %v106 = vld [vmem:[%s0 + $0xf4] sm:$0xf]
    %v107 = vld [vmem:[%s0 + $0xf8] sm:$0xf]
    %v108 = vld [vmem:[%s0 + $0xfc] sm:$0xf]
    %v109 = vld [vmem:[%s0 + $0x100] sm:$0xf]
    %v110 = vld [vmem:[%s0 + $0x104] sm:$0xf]
    %v111 = vld [vmem:[%s0 + $0x108] sm:$0xf]
    %v112 = vld [vmem:[%s0 + $0x10c] sm:$0xf]
    %v113 = vld [vmem:[%s0 + $0x110] sm:$0xf]
    %v114 = vld [vmem:[%s0 + $0x114] sm:$0xf]
    %v115 = vld [vmem:[%s0 + $0x118] sm:$0xf]
    %v116 = vld [vmem:[%s0 + $0x11c] sm:$0xf]
    %v117 = vld [vmem:[%s0 + $0x120] sm:$0xf]
    %v118 = vld [vmem:[%s0 + $0x124] sm:$0xf]
    %v119 = vld [vmem:[%s0 + $0x128] sm:$0xf]
    %v120 = vld [vmem:[%s0 + $0x12c] sm:$0xf]
    %v121 = vld [vmem:[%s0 + $0x130] sm:$0xf]
    %v122 = vld [vmem:[%s0 + $0x134] sm:$0xf]
    %v123 = vld [vmem:[%s0 + $0x138] sm:$0xf]
    %v124 = vld [vmem:[%s0 + $0x13c] sm:$0xf]
    %v125 = vld [vmem:[%s0 + $0x140] sm:$0xf]
    %v126 = vld [vmem:[%s0 + $0x144] sm:$0xf]
    %v127 = vld [vmem:[%s0 + $0x148] sm:$0xf]
    %v128 = vld [vmem:[%s0 + $0x14c] sm:$0xf]
    %v129 = vld [vmem:[%s0 + $0x150] sm:$0xf]
    %v130 = vld [vmem:[%s0 + $0x154] sm:$0xf]
    %v131 = vld [vmem:[%s0 + $0x158] sm:$0xf]
    %v132 = vld [vmem:[%s0 + $0x15c] sm:$0xf]
    %v133 = vld [vmem:[%s0 + $0x160] sm:$0xf]
    %v134 = vld [vmem:[%s0 + $0x164] sm:$0xf]
    %v135 = vld [vmem:[%s0 + $0x168] sm:$0xf]
    %v136 = vld [vmem:[%s0 + $0x16c] sm:$0xf]
    %v137 = vld [vmem:[%s0 + $0x170] sm:$0xf]
    %v138 = vld [vmem:[%s0 + $0x174] sm:$0xf]
    %v139 = vld [vmem:[%s0 + $0x178] sm:$0xf]
    %v140 = vld [vmem:[%s0 + $0x17c] sm:$0xf]
    %v141 = vld [vmem:[%s0 + $0x180] sm:$0xf]
    %v142 = vld [vmem:[%s0 + $0x184] sm:$0xf]
    %v143 = vld [vmem:[%s0 + $0x188] sm:$0xf]
    %v144 = vld [vmem:[%s0 + $0x18c] sm:$0xf]
    %v145 = vld [vmem:[%s0 + $0x190] sm:$0xf]
    %v146 = vld [vmem:[%s0 + $0x194] sm:$0xf]
    %v147 = vld [vmem:[%s0 + $0x198] sm:$0xf]
    %v148 = vld [vmem:[%s0 + $0x19c] sm:$0xf]
    %v149 = vld [vmem:[%s0 + $0x1a0] sm:$0xf]
    %v150 = vld [vmem:[%s0 + $0x1a4] sm:$0xf]
    %v151 = vld [vmem:[%s0 + $0x1a8] sm:$0xf]
    %v152 = vld [vmem:[%s0 + $0x1ac] sm:$0xf]
    %v153 = vld [vmem:[%s0 + $0x1b0] sm:$0xf]
    %v154 = vld [vmem:[%s0 + $0x1b4] sm:$0xf]
    %v155 = vld [vmem:[%s0 + $0x1b8] sm:$0xf]
    %v156 = vld [vmem:[%s0 + $0x1bc] sm:$0xf]
    %v157 = vld [vmem:[%s0 + $0x1c0] sm:$0xf]
    %v158 = vld [vmem:[%s0 + $0x1c4] sm:$0xf]
    %v159 = vld [vmem:[%s0 + $0x1c8] sm:$0xf]
    %v160 = vld [vmem:[%s0 + $0x1cc] sm:$0xf]
    %v161 = vld [vmem:[%s0 + $0x1d0] sm:$0xf]
    %v162 = vld [vmem:[%s0 + $0x1d4] sm:$0xf]
    %v163 = vld [vmem:[%s0 + $0x1d8] sm:$0xf]
    %v164 = vld [vmem:[%s0 + $0x1dc] sm:$0xf]
    %v165 = vld [vmem:[%s0 + $0x1e0] sm:$0xf]
    %v166 = vld [vmem:[%s0 + $0x1e4] sm:$0xf]
    %v167 = vld [vmem:[%s0 + $0x1e8] sm:$0xf]
    %v168 = vld [vmem:[%s0 + $0x1ec] sm:$0xf]
    %v169 = vld [vmem:[%s0 + $0x1f0] sm:$0xf]
    %v170 = vld [vmem:[%s0 + $0x1f4] sm:$0xf]
    %v171 = vld [vmem:[%s0 + $0x1f8] sm:$0xf]
    %v172 = vld [vmem:[%s0 + $0x1fc] sm:$0xf]
    %v173 = vld [vmem:[%s0 + $0x200] sm:$0xf]
    %v174 = vld [vmem:[%s0 + $0x204] sm:$0xf]
    %v175 = vld [vmem:[%s0 + $0x208] sm:$0xf]
    %v176 = vld [vmem:[%s0 + $0x20c] sm:$0xf]
    %v177 = vld [vmem:[%s0 + $0x210] sm:$0xf]
    %v178 = vld [vmem:[%s0 + $0x214] sm:$0xf]
    %v179 = vld [vmem:[%s0 + $0x218] sm:$0xf]
    %v180 = vld [vmem:[%s0 + $0x21c] sm:$0xf]
    %v181 = vld [vmem:[%s0 + $0x220] sm:$0xf]
    %v182 = vld [vmem:[%s0 + $0x224] sm:$0xf]
    %v183 = vld [vmem:[%s0 + $0x228] sm:$0xf]
    %v184 = vld [vmem:[%s0 + $0x22c] sm:$0xf]
    %v185 = vld [vmem:[%s0 + $0x230] sm:$0xf]
    %v186 = vld [vmem:[%s0 + $0x234] sm:$0xf]
    %v187 = vld [vmem:[%s0 + $0x238] sm:$0xf]
    %v188 = vld [vmem:[%s0 + $0x23c] sm:$0xf]
    %v189 = vld [vmem:[%s0 + $0x240] sm:$0xf]
    %v190 = vld [vmem:[%s0 + $0x244] sm:$0xf]
    %v191 = vld [vmem:[%s0 + $0x248] sm:$0xf]
    %v192 = vld [vmem:[%s0 + $0x24c] sm:$0xf]
    %v193 = vld [vmem:[%s0 + $0x250] sm:$0xf]
    %v194 = vld [vmem:[%s0 + $0x254] sm:$0xf]
    %v195 = vld [vmem:[%s0 + $0x258] sm:$0xf]
    %v196 = vld [vmem:[%s0 + $0x25c] sm:$0xf]
    %v197 = vld [vmem:[%s0 + $0x260] sm:$0xf]
    %v198 = vld [vmem:[%s0 + $0x264] sm:$0xf]
    %v199 = vld [vmem:[%s0 + $0x268] sm:$0xf]
    %v200 = vld [vmem:[%s0 + $0x26c] sm:$0xf]
    %v201 = vld [vmem:[%s0 + $0x270] sm:$0xf]
    %v202 = vld [vmem:[%s0 + $0x274] sm:$0xf]
    %v203 = vld [vmem:[%s0 + $0x278] sm:$0xf]
    %v204 = vld [vmem:[%s0 + $0x27c] sm:$0xf]
    %v205 = vld [vmem:[%s0 + $0x280] sm:$0xf]
    %v206 = vld [vmem:[%s0 + $0x284] sm:$0xf]
    %v207 = vld [vmem:[%s0 + $0x288] sm:$0xf]
    %v208 = vld [vmem:[%s0 + $0x28c] sm:$0xf]
    %v209 = vld [vmem:[%s0 + $0x290] sm:$0xf]
    %v210 = vld [vmem:[%s0 + $0x294] sm:$0xf]
    %v211 = vld [vmem:[%s0 + $0x298] sm:$0xf]
    %v212 = vld [vmem:[%s0 + $0x29c] sm:$0xf]
    %v213 = vld [vmem:[%s0 + $0x2a0] sm:$0xf]
    %v214 = vld [vmem:[%s0 + $0x2a4] sm:$0xf]
    %v215 = vld [vmem:[%s0 + $0x2a8] sm:$0xf]
    %v216 = vld [vmem:[%s0 + $0x2ac] sm:$0xf]
    %v217 = vld [vmem:[%s0 + $0x2b0] sm:$0xf]
    %v218 = vld [vmem:[%s0 + $0x2b4] sm:$0xf]
    %v219 = vld [vmem:[%s0 + $0x2b8] sm:$0xf]
    %v220 = vld [vmem:[%s0 + $0x2bc] sm:$0xf]
    %v221 = vld [vmem:[%s0 + $0x2c0] sm:$0xf]
    %v222 = vld [vmem:[%s0 + $0x2c4] sm:$0xf]
    %v223 = vld [vmem:[%s0 + $0x2c8] sm:$0xf]
    %v224 = vld [vmem:[%s0 + $0x2cc] sm:$0xf]
    %v225 = vld [vmem:[%s0 + $0x2d0] sm:$0xf]
    %v226 = vld [vmem:[%s0 + $0x2d4] sm:$0xf]
    %v227 = vld [vmem:[%s0 + $0x2d8] sm:$0xf]
    %v228 = vld [vmem:[%s0 + $0x2dc] sm:$0xf]
    %v229 = vld [vmem:[%s0 + $0x2e0] sm:$0xf]
    %v230 = vld [vmem:[%s0 + $0x2e4] sm:$0xf]
    %v231 = vld [vmem:[%s0 + $0x2e8] sm:$0xf]
    %v232 = vld [vmem:[%s0 + $0x2ec] sm:$0xf]
    %v233 = vld [vmem:[%s0 + $0x2f0] sm:$0xf]
    %v234 = vld [vmem:[%s0 + $0x2f4] sm:$0xf]
    %v235 = vld [vmem:[%s0 + $0x2f8] sm:$0xf]
    %v236 = vld [vmem:[%s0 + $0x2fc] sm:$0xf]
    %v237 = vld [vmem:[%s0 + $0x300] sm:$0xf]
    %v238 = vld [vmem:[%s0 + $0x304] sm:$0xf]
    %v239 = vld [vmem:[%s0 + $0x308] sm:$0xf]
    %v240 = vld [vmem:[%s0 + $0x30c] sm:$0xf]
    %v241 = vld [vmem:[%s0 + $0x310] sm:$0xf]
    %v242 = vld [vmem:[%s0 + $0x314] sm:$0xf]
    %v243 = vld [vmem:[%s0 + $0x318] sm:$0xf]
    %v244 = vld [vmem:[%s0 + $0x31c] sm:$0xf]
    %v245 = vld [vmem:[%s0 + $0x320] sm:$0xf]
    %v246 = vld [vmem:[%s0 + $0x324] sm:$0xf]
    %v247 = vld [vmem:[%s0 + $0x328] sm:$0xf]
    %v248 = vld [vmem:[%s0 + $0x32c] sm:$0xf]
    %v249 = vld [vmem:[%s0 + $0x330] sm:$0xf]
    %v250 = vld [vmem:[%s0 + $0x334] sm:$0xf]
    %v251 = vld [vmem:[%s0 + $0x338] sm:$0xf]
    %v252 = vld [vmem:[%s0 + $0x33c] sm:$0xf]
    %v253 = vld [vmem:[%s0 + $0x340] sm:$0xf]
    %v254 = vld [vmem:[%s0 + $0x344] sm:$0xf]
    %v255 = vld [vmem:[%s0 + $0x348] sm:$0xf]
    %v256 = vld [vmem:[%s0 + $0x34c] sm:$0xf]
    %v257 = vld [vmem:[%s0 + $0x350] sm:$0xf]
    %v258 = vld [vmem:[%s0 + $0x354] sm:$0xf]
    %v259 = vld [vmem:[%s0 + $0x358] sm:$0xf]
    %v260 = vld [vmem:[%s0 + $0x35c] sm:$0xf]
    %v261 = vld [vmem:[%s0 + $0x360] sm:$0xf]
    %v262 = vld [vmem:[%s0 + $0x364] sm:$0xf]
    %v263 = vld [vmem:[%s0 + $0x368] sm:$0xf]
    %v264 = vld [vmem:[%s0 + $0x36c] sm:$0xf]
    %v265 = vld [vmem:[%s0 + $0x370] sm:$0xf]
    %v266 = vld [vmem:[%s0 + $0x374] sm:$0xf]
    %v267 = vld [vmem:[%s0 + $0x378] sm:$0xf]
    %v268 = vld [vmem:[%s0 + $0x37c] sm:$0xf]
    %v269 = vld [vmem:[%s0 + $0x380] sm:$0xf]
    %v270 = vld [vmem:[%s0 + $0x384] sm:$0xf]
    %v271 = vld [vmem:[%s0 + $0x388] sm:$0xf]
    %v272 = vld [vmem:[%s0 + $0x38c] sm:$0xf]
    %v273 = vld [vmem:[%s0 + $0x390] sm:$0xf]
    %v274 = vld [vmem:[%s0 + $0x394] sm:$0xf]
    %v275 = vld [vmem:[%s0 + $0x398] sm:$0xf]
    %v276 = vld [vmem:[%s0 + $0x39c] sm:$0xf]
    %v277 = vld [vmem:[%s0 + $0x3a0] sm:$0xf]
    %v278 = vld [vmem:[%s0 + $0x3a4] sm:$0xf]
    %v279 = vld [vmem:[%s0 + $0x3a8] sm:$0xf]
    %v280 = vld [vmem:[%s0 + $0x3ac] sm:$0xf]
    %v281 = vld [vmem:[%s0 + $0x3b0] sm:$0xf]
    %v282 = vld [vmem:[%s0 + $0x3b4] sm:$0xf]
    %v283 = vld [vmem:[%s0 + $0x3b8] sm:$0xf]
    %v284 = vld [vmem:[%s0 + $0x3bc] sm:$0xf]
    %v285 = vld [vmem:[%s0 + $0x3c0] sm:$0xf]
    %v286 = vld [vmem:[%s0 + $0x3c4] sm:$0xf]
    %v287 = vld [vmem:[%s0 + $0x3c8] sm:$0xf]
    %v288 = vld [vmem:[%s0 + $0x3cc] sm:$0xf]
    %v289 = vld [vmem:[%s0 + $0x3d0] sm:$0xf]
    %v290 = vld [vmem:[%s0 + $0x3d4] sm:$0xf]
    %v291 = vld [vmem:[%s0 + $0x3d8] sm:$0xf]
    %v292 = vld [vmem:[%s0 + $0x3dc] sm:$0xf]
    %v293 = vld [vmem:[%s0 + $0x3e0] sm:$0xf]
    %v294 = vld [vmem:[%s0 + $0x3e4] sm:$0xf]
    %v295 = vld [vmem:[%s0 + $0x3e8] sm:$0xf]
    %v296 = vld [vmem:[%s0 + $0x3ec] sm:$0xf]
    %v297 = vld [vmem:[%s0 + $0x3f0] sm:$0xf]
    %v298 = vld [vmem:[%s0 + $0x3f4] sm:$0xf]
    %v299 = vld [vmem:[%s0 + $0x3f8] sm:$0xf]
    %v300 = vld [vmem:[%s0 + $0x3fc] sm:$0xf]
    %v333 = vunpack.c.l.b16 %v13
    %v334 = vunpack.c.h.b16 %v13
    %v335 = vunpack.c.l.b16 %v14
    %v336 = vunpack.c.h.b16 %v14
    %v337 = vunpack.c.l.b16 %v15
    %v338 = vunpack.c.h.b16 %v15
    %v339 = vunpack.c.l.b16 %v16
    %v340 = vunpack.c.h.b16 %v16
    %v341 = vunpack.c.l.b16 %v17
    %v342 = vunpack.c.h.b16 %v17
    %v343 = vunpack.c.l.b16 %v18
    %v344 = vunpack.c.h.b16 %v18
    %v345 = vunpack.c.l.b16 %v19
    %v346 = vunpack.c.h.b16 %v19
    %v347 = vunpack.c.l.b16 %v20
    %v348 = vunpack.c.h.b16 %v20
    %v349 = vunpack.c.l.b16 %v21
    %v350 = vunpack.c.h.b16 %v21
    %v351 = vunpack.c.l.b16 %v22
    %v352 = vunpack.c.h.b16 %v22
    %v353 = vunpack.c.l.b16 %v23
    %v354 = vunpack.c.h.b16 %v23
    %v355 = vunpack.c.l.b16 %v24
    %v356 = vunpack.c.h.b16 %v24
    %v357 = vunpack.c.l.b16 %v25
    %v358 = vunpack.c.h.b16 %v25
    %v359 = vunpack.c.l.b16 %v26
    %v360 = vunpack.c.h.b16 %v26
    %v361 = vunpack.c.l.b16 %v27
    %v362 = vunpack.c.h.b16 %v27
    %v363 = vunpack.c.l.b16 %v28
    %v364 = vunpack.c.h.b16 %v28
    %v365 = vunpack.c.l.b16 %v29
    %v366 = vunpack.c.h.b16 %v29
    %v367 = vunpack.c.l.b16 %v30
    %v368 = vunpack.c.h.b16 %v30
    %v369 = vunpack.c.l.b16 %v31
    %v370 = vunpack.c.h.b16 %v31
    %v371 = vunpack.c.l.b16 %v32
    %v372 = vunpack.c.h.b16 %v32
    %v373 = vunpack.c.l.b16 %v33
    %v374 = vunpack.c.h.b16 %v33
    %v375 = vunpack.c.l.b16 %v34
    %v376 = vunpack.c.h.b16 %v34
    %v377 = vunpack.c.l.b16 %v35
    %v378 = vunpack.c.h.b16 %v35
    %v379 = vunpack.c.l.b16 %v36
    %v380 = vunpack.c.h.b16 %v36
    %v381 = vunpack.c.l.b16 %v37
    %v382 = vunpack.c.h.b16 %v37
    %v383 = vunpack.c.l.b16 %v38
    %v384 = vunpack.c.h.b16 %v38
    %v385 = vunpack.c.l.b16 %v39
    %v386 = vunpack.c.h.b16 %v39
    %v387 = vunpack.c.l.b16 %v40
    %v388 = vunpack.c.h.b16 %v40
    %v389 = vunpack.c.l.b16 %v41
    %v390 = vunpack.c.h.b16 %v41
    %v391 = vunpack.c.l.b16 %v42
    %v392 = vunpack.c.h.b16 %v42
    %v393 = vunpack.c.l.b16 %v43
    %v394 = vunpack.c.h.b16 %v43
    %v395 = vunpack.c.l.b16 %v44
    %v396 = vunpack.c.h.b16 %v44
    %v397 = vpack.c.b16 %v349, %v333
    %v398 = vpack.c.b16 %v350, %v334
    %v399 = vpack.c.b16 %v351, %v335
    %v400 = vpack.c.b16 %v352, %v336
    %v401 = vpack.c.b16 %v353, %v337
    %v402 = vpack.c.b16 %v354, %v338
    %v403 = vpack.c.b16 %v355, %v339
    %v404 = vpack.c.b16 %v356, %v340
    %v405 = vpack.c.b16 %v357, %v341
    %v406 = vpack.c.b16 %v358, %v342
    %v407 = vpack.c.b16 %v359, %v343
    %v408 = vpack.c.b16 %v360, %v344
    %v409 = vpack.c.b16 %v361, %v345
    %v410 = vpack.c.b16 %v362, %v346
    %v411 = vpack.c.b16 %v363, %v347
    %v412 = vpack.c.b16 %v364, %v348
    %v413 = vpack.c.b16 %v381, %v365
    %v414 = vpack.c.b16 %v382, %v366
    %v415 = vpack.c.b16 %v383, %v367
    %v416 = vpack.c.b16 %v384, %v368
    %v417 = vpack.c.b16 %v385, %v369
    %v418 = vpack.c.b16 %v386, %v370
    %v419 = vpack.c.b16 %v387, %v371
    %v420 = vpack.c.b16 %v388, %v372
    %v421 = vpack.c.b16 %v389, %v373
    %v422 = vpack.c.b16 %v390, %v374
    %v423 = vpack.c.b16 %v391, %v375
    %v424 = vpack.c.b16 %v392, %v376
    %v425 = vpack.c.b16 %v393, %v377
    %v426 = vpack.c.b16 %v394, %v378
    %v427 = vpack.c.b16 %v395, %v379
    %v428 = vpack.c.b16 %v396, %v380
    %v717 = vunpack.c.l.b16 %v45
    %v718 = vunpack.c.l.b16 %v46
    %v719 = vunpack.c.l.b16 %v47
    %v720 = vunpack.c.l.b16 %v48
    %v721 = vunpack.c.l.b16 %v49
    %v722 = vunpack.c.l.b16 %v50
    %v723 = vunpack.c.l.b16 %v51
    %v724 = vunpack.c.l.b16 %v52
    %v725 = vunpack.c.l.b16 %v53
    %v726 = vunpack.c.l.b16 %v54
    %v727 = vunpack.c.l.b16 %v55
    %v728 = vunpack.c.l.b16 %v56
    %v729 = vunpack.c.l.b16 %v57
    %v730 = vunpack.c.l.b16 %v58
    %v731 = vunpack.c.l.b16 %v59
    %v732 = vunpack.c.l.b16 %v60
    %v733 = vunpack.c.l.b16 %v61
    %v734 = vunpack.c.l.b16 %v62
    %v735 = vunpack.c.l.b16 %v63
    %v736 = vunpack.c.l.b16 %v64
    %v737 = vunpack.c.l.b16 %v65
    %v738 = vunpack.c.l.b16 %v66
    %v739 = vunpack.c.l.b16 %v67
    %v740 = vunpack.c.l.b16 %v68
    %v741 = vunpack.c.l.b16 %v69
    %v742 = vunpack.c.l.b16 %v70
    %v743 = vunpack.c.l.b16 %v71
    %v744 = vunpack.c.l.b16 %v72
    %v745 = vunpack.c.l.b16 %v73
    %v746 = vunpack.c.l.b16 %v74
    %v747 = vunpack.c.l.b16 %v75
    %v748 = vunpack.c.l.b16 %v76
    %v749 = vunpack.c.l.b16 %v77
    %v750 = vunpack.c.l.b16 %v78
    %v751 = vunpack.c.l.b16 %v79
    %v752 = vunpack.c.l.b16 %v80
    %v753 = vunpack.c.l.b16 %v81
    %v754 = vunpack.c.l.b16 %v82
    %v755 = vunpack.c.l.b16 %v83
    %v756 = vunpack.c.l.b16 %v84
    %v757 = vunpack.c.l.b16 %v85
    %v758 = vunpack.c.l.b16 %v86
    %v759 = vunpack.c.l.b16 %v87
    %v760 = vunpack.c.l.b16 %v88
    %v761 = vunpack.c.l.b16 %v89
    %v762 = vunpack.c.l.b16 %v90
    %v763 = vunpack.c.l.b16 %v91
    %v764 = vunpack.c.l.b16 %v92
    %v765 = vunpack.c.l.b16 %v93
    %v766 = vunpack.c.l.b16 %v94
    %v767 = vunpack.c.l.b16 %v95
    %v768 = vunpack.c.l.b16 %v96
    %v769 = vunpack.c.l.b16 %v97
    %v770 = vunpack.c.l.b16 %v98
    %v771 = vunpack.c.l.b16 %v99
    %v772 = vunpack.c.l.b16 %v100
    %v773 = vunpack.c.l.b16 %v101
    %v774 = vunpack.c.l.b16 %v102
    %v775 = vunpack.c.l.b16 %v103
    %v776 = vunpack.c.l.b16 %v104
    %v777 = vunpack.c.l.b16 %v105
    %v778 = vunpack.c.l.b16 %v106
    %v779 = vunpack.c.l.b16 %v107
    %v780 = vunpack.c.l.b16 %v108
    %v781 = vunpack.c.l.b16 %v109
    %v782 = vunpack.c.l.b16 %v110
    %v783 = vunpack.c.l.b16 %v111
    %v784 = vunpack.c.l.b16 %v112
    %v785 = vunpack.c.l.b16 %v113
    %v786 = vunpack.c.l.b16 %v114
    %v787 = vunpack.c.l.b16 %v115
    %v788 = vunpack.c.l.b16 %v116
    %v789 = vunpack.c.l.b16 %v117
    %v790 = vunpack.c.l.b16 %v118
    %v791 = vunpack.c.l.b16 %v119
    %v792 = vunpack.c.l.b16 %v120
    %v793 = vunpack.c.l.b16 %v121
    %v794 = vunpack.c.l.b16 %v122
    %v795 = vunpack.c.l.b16 %v123
    %v796 = vunpack.c.l.b16 %v124
    %v797 = vunpack.c.l.b16 %v125
    %v798 = vunpack.c.l.b16 %v126
    %v799 = vunpack.c.l.b16 %v127
    %v800 = vunpack.c.l.b16 %v128
    %v801 = vunpack.c.l.b16 %v129
    %v802 = vunpack.c.l.b16 %v130
    %v803 = vunpack.c.l.b16 %v131
    %v804 = vunpack.c.l.b16 %v132
    %v805 = vunpack.c.l.b16 %v133
    %v806 = vunpack.c.l.b16 %v134
    %v807 = vunpack.c.l.b16 %v135
    %v808 = vunpack.c.l.b16 %v136
    %v809 = vunpack.c.l.b16 %v137
    %v810 = vunpack.c.l.b16 %v138
    %v811 = vunpack.c.l.b16 %v139
    %v812 = vunpack.c.l.b16 %v140
    %v813 = vunpack.c.l.b16 %v141
    %v814 = vunpack.c.l.b16 %v142
    %v815 = vunpack.c.l.b16 %v143
    %v816 = vunpack.c.l.b16 %v144
    %v817 = vunpack.c.l.b16 %v145
    %v818 = vunpack.c.l.b16 %v146
    %v819 = vunpack.c.l.b16 %v147
    %v820 = vunpack.c.l.b16 %v148
    %v821 = vunpack.c.l.b16 %v149
    %v822 = vunpack.c.l.b16 %v150
    %v823 = vunpack.c.l.b16 %v151
    %v824 = vunpack.c.l.b16 %v152
    %v825 = vunpack.c.l.b16 %v153
    %v826 = vunpack.c.l.b16 %v154
    %v827 = vunpack.c.l.b16 %v155
    %v828 = vunpack.c.l.b16 %v156
    %v829 = vunpack.c.l.b16 %v157
    %v830 = vunpack.c.l.b16 %v158
    %v831 = vunpack.c.l.b16 %v159
    %v832 = vunpack.c.l.b16 %v160
    %v833 = vunpack.c.l.b16 %v161
    %v834 = vunpack.c.l.b16 %v162
    %v835 = vunpack.c.l.b16 %v163
    %v836 = vunpack.c.l.b16 %v164
    %v837 = vunpack.c.l.b16 %v165
    %v838 = vunpack.c.l.b16 %v166
    %v839 = vunpack.c.l.b16 %v167
    %v840 = vunpack.c.l.b16 %v168
    %v841 = vunpack.c.l.b16 %v169
    %v842 = vunpack.c.l.b16 %v170
    %v843 = vunpack.c.l.b16 %v171
    %v844 = vunpack.c.l.b16 %v172
    %v845 = vunpack.c.l.b16 %v173
    %v846 = vunpack.c.l.b16 %v174
    %v847 = vunpack.c.l.b16 %v175
    %v848 = vunpack.c.l.b16 %v176
    %v849 = vunpack.c.l.b16 %v177
    %v850 = vunpack.c.l.b16 %v178
    %v851 = vunpack.c.l.b16 %v179
    %v852 = vunpack.c.l.b16 %v180
    %v853 = vunpack.c.l.b16 %v181
    %v854 = vunpack.c.l.b16 %v182
    %v855 = vunpack.c.l.b16 %v183
    %v856 = vunpack.c.l.b16 %v184
    %v857 = vunpack.c.l.b16 %v185
    %v858 = vunpack.c.l.b16 %v186
    %v859 = vunpack.c.l.b16 %v187
    %v860 = vunpack.c.l.b16 %v188
    %v861 = vunpack.c.l.b16 %v189
    %v862 = vunpack.c.l.b16 %v190
    %v863 = vunpack.c.l.b16 %v191
    %v864 = vunpack.c.l.b16 %v192
    %v865 = vunpack.c.l.b16 %v193
    %v866 = vunpack.c.l.b16 %v194
    %v867 = vunpack.c.l.b16 %v195
    %v868 = vunpack.c.l.b16 %v196
    %v869 = vunpack.c.l.b16 %v197
    %v870 = vunpack.c.l.b16 %v198
    %v871 = vunpack.c.l.b16 %v199
    %v872 = vunpack.c.l.b16 %v200
    %v873 = vunpack.c.l.b16 %v201
    %v874 = vunpack.c.l.b16 %v202
    %v875 = vunpack.c.l.b16 %v203
    %v876 = vunpack.c.l.b16 %v204
    %v877 = vunpack.c.l.b16 %v205
    %v878 = vunpack.c.l.b16 %v206
    %v879 = vunpack.c.l.b16 %v207
    %v880 = vunpack.c.l.b16 %v208
    %v881 = vunpack.c.l.b16 %v209
    %v882 = vunpack.c.l.b16 %v210
    %v883 = vunpack.c.l.b16 %v211
    %v884 = vunpack.c.l.b16 %v212
    %v885 = vunpack.c.l.b16 %v213
    %v886 = vunpack.c.l.b16 %v214
    %v887 = vunpack.c.l.b16 %v215
    %v888 = vunpack.c.l.b16 %v216
    %v889 = vunpack.c.l.b16 %v217
    %v890 = vunpack.c.l.b16 %v218
    %v891 = vunpack.c.l.b16 %v219
    %v892 = vunpack.c.l.b16 %v220
    %v893 = vunpack.c.l.b16 %v221
    %v894 = vunpack.c.l.b16 %v222
    %v895 = vunpack.c.l.b16 %v223
    %v896 = vunpack.c.l.b16 %v224
    %v897 = vunpack.c.l.b16 %v225
    %v898 = vunpack.c.l.b16 %v226
    %v899 = vunpack.c.l.b16 %v227
    %v900 = vunpack.c.l.b16 %v228
    %v901 = vunpack.c.l.b16 %v229
    %v902 = vunpack.c.l.b16 %v230
    %v903 = vunpack.c.l.b16 %v231
    %v904 = vunpack.c.l.b16 %v232
    %v905 = vunpack.c.l.b16 %v233
    %v906 = vunpack.c.l.b16 %v234
    %v907 = vunpack.c.l.b16 %v235
    %v908 = vunpack.c.l.b16 %v236
    %v909 = vunpack.c.l.b16 %v237
    %v910 = vunpack.c.l.b16 %v238
    %v911 = vunpack.c.l.b16 %v239
    %v912 = vunpack.c.l.b16 %v240
    %v913 = vunpack.c.l.b16 %v241
    %v914 = vunpack.c.l.b16 %v242
    %v915 = vunpack.c.l.b16 %v243
    %v916 = vunpack.c.l.b16 %v244
    %v917 = vunpack.c.l.b16 %v245
    %v918 = vunpack.c.l.b16 %v246
    %v919 = vunpack.c.l.b16 %v247
    %v920 = vunpack.c.l.b16 %v248
    %v921 = vunpack.c.l.b16 %v249
    %v922 = vunpack.c.l.b16 %v250
    %v923 = vunpack.c.l.b16 %v251
    %v924 = vunpack.c.l.b16 %v252
    %v925 = vunpack.c.l.b16 %v253
    %v926 = vunpack.c.l.b16 %v254
    %v927 = vunpack.c.l.b16 %v255
    %v928 = vunpack.c.l.b16 %v256
    %v929 = vunpack.c.l.b16 %v257
    %v930 = vunpack.c.l.b16 %v258
    %v931 = vunpack.c.l.b16 %v259
    %v932 = vunpack.c.l.b16 %v260
    %v933 = vunpack.c.l.b16 %v261
    %v934 = vunpack.c.l.b16 %v262
    %v935 = vunpack.c.l.b16 %v263
    %v936 = vunpack.c.l.b16 %v264
    %v937 = vunpack.c.l.b16 %v265
    %v938 = vunpack.c.l.b16 %v266
    %v939 = vunpack.c.l.b16 %v267
    %v940 = vunpack.c.l.b16 %v268
    %v941 = vunpack.c.l.b16 %v269
    %v942 = vunpack.c.l.b16 %v270
    %v943 = vunpack.c.l.b16 %v271
    %v944 = vunpack.c.l.b16 %v272
    %v945 = vunpack.c.l.b16 %v273
    %v946 = vunpack.c.l.b16 %v274
    %v947 = vunpack.c.l.b16 %v275
    %v948 = vunpack.c.l.b16 %v276
    %v949 = vunpack.c.l.b16 %v277
    %v950 = vunpack.c.l.b16 %v278
    %v951 = vunpack.c.l.b16 %v279
    %v952 = vunpack.c.l.b16 %v280
    %v953 = vunpack.c.l.b16 %v281
    %v954 = vunpack.c.l.b16 %v282
    %v955 = vunpack.c.l.b16 %v283
    %v956 = vunpack.c.l.b16 %v284
    %v957 = vunpack.c.l.b16 %v285
    %v958 = vunpack.c.l.b16 %v286
    %v959 = vunpack.c.l.b16 %v287
    %v960 = vunpack.c.l.b16 %v288
    %v961 = vunpack.c.l.b16 %v289
    %v962 = vunpack.c.l.b16 %v290
    %v963 = vunpack.c.l.b16 %v291
    %v964 = vunpack.c.l.b16 %v292
    %v965 = vunpack.c.l.b16 %v293
    %v966 = vunpack.c.l.b16 %v294
    %v967 = vunpack.c.l.b16 %v295
    %v968 = vunpack.c.l.b16 %v296
    %v969 = vunpack.c.l.b16 %v297
    %v970 = vunpack.c.l.b16 %v298
    %v971 = vunpack.c.l.b16 %v299
    %v972 = vunpack.c.l.b16 %v300
    %v973 = vpack.c.b16 %v718, %v717
    %v974 = vpack.c.b16 %v720, %v719
    %v975 = vpack.c.b16 %v722, %v721
    %v976 = vpack.c.b16 %v724, %v723
    %v977 = vpack.c.b16 %v726, %v725
    %v978 = vpack.c.b16 %v728, %v727
    %v979 = vpack.c.b16 %v730, %v729
    %v980 = vpack.c.b16 %v732, %v731
    %v981 = vpack.c.b16 %v734, %v733
    %v982 = vpack.c.b16 %v736, %v735
    %v983 = vpack.c.b16 %v738, %v737
    %v984 = vpack.c.b16 %v740, %v739
    %v985 = vpack.c.b16 %v742, %v741
    %v986 = vpack.c.b16 %v744, %v743
    %v987 = vpack.c.b16 %v746, %v745
    %v988 = vpack.c.b16 %v748, %v747
    %v989 = vpack.c.b16 %v750, %v749
    %v990 = vpack.c.b16 %v752, %v751
    %v991 = vpack.c.b16 %v754, %v753
    %v992 = vpack.c.b16 %v756, %v755
    %v993 = vpack.c.b16 %v758, %v757
    %v994 = vpack.c.b16 %v760, %v759
    %v995 = vpack.c.b16 %v762, %v761
    %v996 = vpack.c.b16 %v764, %v763
    %v997 = vpack.c.b16 %v766, %v765
    %v998 = vpack.c.b16 %v768, %v767
    %v999 = vpack.c.b16 %v770, %v769
    %v1000 = vpack.c.b16 %v772, %v771
    %v1001 = vpack.c.b16 %v774, %v773
    %v1002 = vpack.c.b16 %v776, %v775
    %v1003 = vpack.c.b16 %v778, %v777
    %v1004 = vpack.c.b16 %v780, %v779
    %v1005 = vpack.c.b16 %v782, %v781
    %v1006 = vpack.c.b16 %v784, %v783
    %v1007 = vpack.c.b16 %v786, %v785
    %v1008 = vpack.c.b16 %v788, %v787
    %v1009 = vpack.c.b16 %v790, %v789
    %v1010 = vpack.c.b16 %v792, %v791
    %v1011 = vpack.c.b16 %v794, %v793
    %v1012 = vpack.c.b16 %v796, %v795
    %v1013 = vpack.c.b16 %v798, %v797
    %v1014 = vpack.c.b16 %v800, %v799
    %v1015 = vpack.c.b16 %v802, %v801
    %v1016 = vpack.c.b16 %v804, %v803
    %v1017 = vpack.c.b16 %v806, %v805
    %v1018 = vpack.c.b16 %v808, %v807
    %v1019 = vpack.c.b16 %v810, %v809
    %v1020 = vpack.c.b16 %v812, %v811
    %v1021 = vpack.c.b16 %v814, %v813
    %v1022 = vpack.c.b16 %v816, %v815
    %v1023 = vpack.c.b16 %v818, %v817
    %v1024 = vpack.c.b16 %v820, %v819
    %v1025 = vpack.c.b16 %v822, %v821
    %v1026 = vpack.c.b16 %v824, %v823
    %v1027 = vpack.c.b16 %v826, %v825
    %v1028 = vpack.c.b16 %v828, %v827
    %v1029 = vpack.c.b16 %v830, %v829
    %v1030 = vpack.c.b16 %v832, %v831
    %v1031 = vpack.c.b16 %v834, %v833
    %v1032 = vpack.c.b16 %v836, %v835
    %v1033 = vpack.c.b16 %v838, %v837
    %v1034 = vpack.c.b16 %v840, %v839
    %v1035 = vpack.c.b16 %v842, %v841
    %v1036 = vpack.c.b16 %v844, %v843
    %v1037 = vpack.c.b16 %v846, %v845
    %v1038 = vpack.c.b16 %v848, %v847
    %v1039 = vpack.c.b16 %v850, %v849
    %v1040 = vpack.c.b16 %v852, %v851
    %v1041 = vpack.c.b16 %v854, %v853
    %v1042 = vpack.c.b16 %v856, %v855
    %v1043 = vpack.c.b16 %v858, %v857
    %v1044 = vpack.c.b16 %v860, %v859
    %v1045 = vpack.c.b16 %v862, %v861
    %v1046 = vpack.c.b16 %v864, %v863
    %v1047 = vpack.c.b16 %v866, %v865
    %v1048 = vpack.c.b16 %v868, %v867
    %v1049 = vpack.c.b16 %v870, %v869
    %v1050 = vpack.c.b16 %v872, %v871
    %v1051 = vpack.c.b16 %v874, %v873
    %v1052 = vpack.c.b16 %v876, %v875
    %v1053 = vpack.c.b16 %v878, %v877
    %v1054 = vpack.c.b16 %v880, %v879
    %v1055 = vpack.c.b16 %v882, %v881
    %v1056 = vpack.c.b16 %v884, %v883
    %v1057 = vpack.c.b16 %v886, %v885
    %v1058 = vpack.c.b16 %v888, %v887
    %v1059 = vpack.c.b16 %v890, %v889
    %v1060 = vpack.c.b16 %v892, %v891
    %v1061 = vpack.c.b16 %v894, %v893
    %v1062 = vpack.c.b16 %v896, %v895
    %v1063 = vpack.c.b16 %v898, %v897
    %v1064 = vpack.c.b16 %v900, %v899
    %v1065 = vpack.c.b16 %v902, %v901
    %v1066 = vpack.c.b16 %v904, %v903
    %v1067 = vpack.c.b16 %v906, %v905
    %v1068 = vpack.c.b16 %v908, %v907
    %v1069 = vpack.c.b16 %v910, %v909
    %v1070 = vpack.c.b16 %v912, %v911
    %v1071 = vpack.c.b16 %v914, %v913
    %v1072 = vpack.c.b16 %v916, %v915
    %v1073 = vpack.c.b16 %v918, %v917
    %v1074 = vpack.c.b16 %v920, %v919
    %v1075 = vpack.c.b16 %v922, %v921
    %v1076 = vpack.c.b16 %v924, %v923
    %v1077 = vpack.c.b16 %v926, %v925
    %v1078 = vpack.c.b16 %v928, %v927
    %v1079 = vpack.c.b16 %v930, %v929
    %v1080 = vpack.c.b16 %v932, %v931
    %v1081 = vpack.c.b16 %v934, %v933
    %v1082 = vpack.c.b16 %v936, %v935
    %v1083 = vpack.c.b16 %v938, %v937
    %v1084 = vpack.c.b16 %v940, %v939
    %v1085 = vpack.c.b16 %v942, %v941
    %v1086 = vpack.c.b16 %v944, %v943
    %v1087 = vpack.c.b16 %v946, %v945
    %v1088 = vpack.c.b16 %v948, %v947
    %v1089 = vpack.c.b16 %v950, %v949
    %v1090 = vpack.c.b16 %v952, %v951
    %v1091 = vpack.c.b16 %v954, %v953
    %v1092 = vpack.c.b16 %v956, %v955
    %v1093 = vpack.c.b16 %v958, %v957
    %v1094 = vpack.c.b16 %v960, %v959
    %v1095 = vpack.c.b16 %v962, %v961
    %v1096 = vpack.c.b16 %v964, %v963
    %v1097 = vpack.c.b16 %v966, %v965
    %v1098 = vpack.c.b16 %v968, %v967
    %v1099 = vpack.c.b16 %v970, %v969
    %v1100 = vpack.c.b16 %v972, %v971
    %1229 = vmatprep.subr.bf16.mxu0 0
    %1230 = vmatpush1.bf16.msra.mxu0 %v973
    %1231 = vmatprep.subr.bf16.mxu0 0
    %1232 = vmatpush1.bf16.msra.mxu0 %v974
    %1233 = vmatprep.subr.bf16.mxu0 0
    %1234 = vmatpush1.bf16.msra.mxu0 %v975
    %1235 = vmatprep.subr.bf16.mxu0 0
    %1236 = vmatpush1.bf16.msra.mxu0 %v976
    %1237 = vmatprep.subr.bf16.mxu0 0
    %1238 = vmatpush1.bf16.msra.mxu0 %v977
    %1239 = vmatprep.subr.bf16.mxu0 0
    %1240 = vmatpush1.bf16.msra.mxu0 %v978
    %1241 = vmatprep.subr.bf16.mxu0 0
    %1242 = vmatpush1.bf16.msra.mxu0 %v979
    %1243 = vmatprep.subr.bf16.mxu0 0
    %1244 = vmatpush1.bf16.msra.mxu0 %v980
    %1245 = vmatprep.subr.bf16.mxu0 0
    %1246 = vmatpush1.bf16.msra.mxu0 %v981
    %1247 = vmatprep.subr.bf16.mxu0 0
    %1248 = vmatpush1.bf16.msra.mxu0 %v982
    %1249 = vmatprep.subr.bf16.mxu0 0
    %1250 = vmatpush1.bf16.msra.mxu0 %v983
    %1251 = vmatprep.subr.bf16.mxu0 0
    %1252 = vmatpush1.bf16.msra.mxu0 %v984
    %1253 = vmatprep.subr.bf16.mxu0 0
    %1254 = vmatpush1.bf16.msra.mxu0 %v985
    %1255 = vmatprep.subr.bf16.mxu0 0
    %1256 = vmatpush1.bf16.msra.mxu0 %v986
    %1257 = vmatprep.subr.bf16.mxu0 0
    %1258 = vmatpush1.bf16.msra.mxu0 %v987
    %1259 = vmatprep.subr.bf16.mxu0 0
    %1260 = vmatpush1.bf16.msra.mxu0 %v988
    %1261 = vmatprep.mubr.bf16.mxu0 %v398
    %1262 = vmatmul.mubr.bf16.gmra.mrb[0].mxu0 %v397
    %v1263 = vpop.f32.mrb[0].mxu0
    %v1264 = vadd.f32 0.0, %v1263
    %v1265 = vpop.f32.mrb[0].mxu0
    %v1266 = vpop.f32.mrb[0].mxu0
    %v1267 = vadd.f32 0.0, %v1266
    %v1268 = vpop.f32.mrb[0].mxu0
    %1269 = vmatprep.mubr.bf16.mxu0 %v414
    %1270 = vmatmul.mubr.bf16.gmra.mrb[0].mxu0 %v413
    %v1271 = vpop.f32.mrb[0].mxu0
    %v1272 = vadd.f32 0.0, %v1271
    %v1273 = vpop.f32.mrb[0].mxu0
    %v1274 = vpop.f32.mrb[0].mxu0
    %v1275 = vadd.f32 0.0, %v1274
    %v1276 = vpop.f32.mrb[0].mxu0
    %1277 = vdwg.mxu0
    %1278 = vmatprep.subr.bf16.mxu0 0
    %1279 = vmatpush1.bf16.msra.mxu0 %v989
    %1280 = vmatprep.subr.bf16.mxu0 0
    %1281 = vmatpush1.bf16.msra.mxu0 %v990
    %1282 = vmatprep.subr.bf16.mxu0 0
    %1283 = vmatpush1.bf16.msra.mxu0 %v991
    %1284 = vmatprep.subr.bf16.mxu0 0
    %1285 = vmatpush1.bf16.msra.mxu0 %v992
    %1286 = vmatprep.subr.bf16.mxu0 0
    %1287 = vmatpush1.bf16.msra.mxu0 %v993
    %1288 = vmatprep.subr.bf16.mxu0 0
    %1289 = vmatpush1.bf16.msra.mxu0 %v994
    %1290 = vmatprep.subr.bf16.mxu0 0
    %1291 = vmatpush1.bf16.msra.mxu0 %v995
    %1292 = vmatprep.subr.bf16.mxu0 0
    %1293 = vmatpush1.bf16.msra.mxu0 %v996
    %1294 = vmatprep.subr.bf16.mxu0 0
    %1295 = vmatpush1.bf16.msra.mxu0 %v997
    %1296 = vmatprep.subr.bf16.mxu0 0
    %1297 = vmatpush1.bf16.msra.mxu0 %v998
    %1298 = vmatprep.subr.bf16.mxu0 0
    %1299 = vmatpush1.bf16.msra.mxu0 %v999
    %1300 = vmatprep.subr.bf16.mxu0 0
    %1301 = vmatpush1.bf16.msra.mxu0 %v1000
    %1302 = vmatprep.subr.bf16.mxu0 0
    %1303 = vmatpush1.bf16.msra.mxu0 %v1001
    %1304 = vmatprep.subr.bf16.mxu0 0
    %1305 = vmatpush1.bf16.msra.mxu0 %v1002
    %1306 = vmatprep.subr.bf16.mxu0 0
    %1307 = vmatpush1.bf16.msra.mxu0 %v1003
    %1308 = vmatprep.subr.bf16.mxu0 0
    %1309 = vmatpush1.bf16.msra.mxu0 %v1004
    %1310 = vmatprep.mubr.bf16.mxu0 %v400
    %1311 = vmatmul.mubr.bf16.gmra.mrb[0].mxu0 %v399
    %v1312 = vpop.f32.mrb[0].mxu0
    %v1313 = vadd.f32 %v1264, %v1312
    %v1314 = vpop.f32.mrb[0].mxu0
    %v1315 = vpop.f32.mrb[0].mxu0
    %v1316 = vadd.f32 %v1267, %v1315
    %v1317 = vpop.f32.mrb[0].mxu0
    %1318 = vmatprep.mubr.bf16.mxu0 %v416
    %1319 = vmatmul.mubr.bf16.gmra.mrb[0].mxu0 %v415
    %v1320 = vpop.f32.mrb[0].mxu0
    %v1321 = vadd.f32 %v1272, %v1320
    %v1322 = vpop.f32.mrb[0].mxu0
    %v1323 = vpop.f32.mrb[0].mxu0
    %v1324 = vadd.f32 %v1275, %v1323
    %v1325 = vpop.f32.mrb[0].mxu0
    %1326 = vdwg.mxu0
    %1327 = vmatprep.subr.bf16.mxu0 0
    %1328 = vmatpush1.bf16.msra.mxu0 %v1005
    %1329 = vmatprep.subr.bf16.mxu0 0
    %1330 = vmatpush1.bf16.msra.mxu0 %v1006
    %1331 = vmatprep.subr.bf16.mxu0 0
    %1332 = vmatpush1.bf16.msra.mxu0 %v1007
    %1333 = vmatprep.subr.bf16.mxu0 0
    %1334 = vmatpush1.bf16.msra.mxu0 %v1008
    %1335 = vmatprep.subr.bf16.mxu0 0
    %1336 = vmatpush1.bf16.msra.mxu0 %v1009
    %1337 = vmatprep.subr.bf16.mxu0 0
    %1338 = vmatpush1.bf16.msra.mxu0 %v1010
    %1339 = vmatprep.subr.bf16.mxu0 0
    %1340 = vmatpush1.bf16.msra.mxu0 %v1011
    %1341 = vmatprep.subr.bf16.mxu0 0
    %1342 = vmatpush1.bf16.msra.mxu0 %v1012
    %1343 = vmatprep.subr.bf16.mxu0 0
    %1344 = vmatpush1.bf16.msra.mxu0 %v1013
    %1345 = vmatprep.subr.bf16.mxu0 0
    %1346 = vmatpush1.bf16.msra.mxu0 %v1014
    %1347 = vmatprep.subr.bf16.mxu0 0
    %1348 = vmatpush1.bf16.msra.mxu0 %v1015
    %1349 = vmatprep.subr.bf16.mxu0 0
    %1350 = vmatpush1.bf16.msra.mxu0 %v1016
    %1351 = vmatprep.subr.bf16.mxu0 0
    %1352 = vmatpush1.bf16.msra.mxu0 %v1017
    %1353 = vmatprep.subr.bf16.mxu0 0
    %1354 = vmatpush1.bf16.msra.mxu0 %v1018
    %1355 = vmatprep.subr.bf16.mxu0 0
    %1356 = vmatpush1.bf16.msra.mxu0 %v1019
    %1357 = vmatprep.subr.bf16.mxu0 0
    %1358 = vmatpush1.bf16.msra.mxu0 %v1020
    %1359 = vmatprep.mubr.bf16.mxu0 %v402
    %1360 = vmatmul.mubr.bf16.gmra.mrb[0].mxu0 %v401
    %v1361 = vpop.f32.mrb[0].mxu0
    %v1362 = vadd.f32 %v1313, %v1361
    %v1363 = vpop.f32.mrb[0].mxu0
    %v1364 = vpop.f32.mrb[0].mxu0
    %v1365 = vadd.f32 %v1316, %v1364
    %v1366 = vpop.f32.mrb[0].mxu0
    %1367 = vmatprep.mubr.bf16.mxu0 %v418
    %1368 = vmatmul.mubr.bf16.gmra.mrb[0].mxu0 %v417
    %v1369 = vpop.f32.mrb[0].mxu0
    %v1370 = vadd.f32 %v1321, %v1369
    %v1371 = vpop.f32.mrb[0].mxu0
    %v1372 = vpop.f32.mrb[0].mxu0
    %v1373 = vadd.f32 %v1324, %v1372
    %v1374 = vpop.f32.mrb[0].mxu0
    %1375 = vdwg.mxu0
    %1376 = vmatprep.subr.bf16.mxu0 0
    %1377 = vmatpush1.bf16.msra.mxu0 %v1021
    %1378 = vmatprep.subr.bf16.mxu0 0
    %1379 = vmatpush1.bf16.msra.mxu0 %v1022
    %1380 = vmatprep.subr.bf16.mxu0 0
    %1381 = vmatpush1.bf16.msra.mxu0 %v1023
    %1382 = vmatprep.subr.bf16.mxu0 0
    %1383 = vmatpush1.bf16.msra.mxu0 %v1024
    %1384 = vmatprep.subr.bf16.mxu0 0
    %1385 = vmatpush1.bf16.msra.mxu0 %v1025
    %1386 = vmatprep.subr.bf16.mxu0 0
    %1387 = vmatpush1.bf16.msra.mxu0 %v1026
    %1388 = vmatprep.subr.bf16.mxu0 0
    %1389 = vmatpush1.bf16.msra.mxu0 %v1027
    %1390 = vmatprep.subr.bf16.mxu0 0
    %1391 = vmatpush1.bf16.msra.mxu0 %v1028
    %1392 = vmatprep.subr.bf16.mxu0 0
    %1393 = vmatpush1.bf16.msra.mxu0 %v1029
    %1394 = vmatprep.subr.bf16.mxu0 0
    %1395 = vmatpush1.bf16.msra.mxu0 %v1030
    %1396 = vmatprep.subr.bf16.mxu0 0
    %1397 = vmatpush1.bf16.msra.mxu0 %v1031
    %1398 = vmatprep.subr.bf16.mxu0 0
    %1399 = vmatpush1.bf16.msra.mxu0 %v1032
    %1400 = vmatprep.subr.bf16.mxu0 0
    %1401 = vmatpush1.bf16.msra.mxu0 %v1033
    %1402 = vmatprep.subr.bf16.mxu0 0
    %1403 = vmatpush1.bf16.msra.mxu0 %v1034
    %1404 = vmatprep.subr.bf16.mxu0 0
    %1405 = vmatpush1.bf16.msra.mxu0 %v1035
    %1406 = vmatprep.subr.bf16.mxu0 0
    %1407 = vmatpush1.bf16.msra.mxu0 %v1036
    %1408 = vmatprep.mubr.bf16.mxu0 %v404
    %1409 = vmatmul.mubr.bf16.gmra.mrb[0].mxu0 %v403
    %v1410 = vpop.f32.mrb[0].mxu0
    %v1411 = vadd.f32 %v1362, %v1410
    %v1412 = vpop.f32.mrb[0].mxu0
    %v1413 = vpop.f32.mrb[0].mxu0
    %v1414 = vadd.f32 %v1365, %v1413
    %v1415 = vpop.f32.mrb[0].mxu0
    %1416 = vmatprep.mubr.bf16.mxu0 %v420
    %1417 = vmatmul.mubr.bf16.gmra.mrb[0].mxu0 %v419
    %v1418 = vpop.f32.mrb[0].mxu0
    %v1419 = vadd.f32 %v1370, %v1418
    %v1420 = vpop.f32.mrb[0].mxu0
    %v1421 = vpop.f32.mrb[0].mxu0
    %v1422 = vadd.f32 %v1373, %v1421
    %v1423 = vpop.f32.mrb[0].mxu0
    %1424 = vdwg.mxu0
    %1425 = vmatprep.subr.bf16.mxu0 0
    %1426 = vmatpush1.bf16.msra.mxu0 %v1037
    %1427 = vmatprep.subr.bf16.mxu0 0
    %1428 = vmatpush1.bf16.msra.mxu0 %v1038
    %1429 = vmatprep.subr.bf16.mxu0 0
    %1430 = vmatpush1.bf16.msra.mxu0 %v1039
    %1431 = vmatprep.subr.bf16.mxu0 0
    %1432 = vmatpush1.bf16.msra.mxu0 %v1040
    %1433 = vmatprep.subr.bf16.mxu0 0
    %1434 = vmatpush1.bf16.msra.mxu0 %v1041
    %1435 = vmatprep.subr.bf16.mxu0 0
    %1436 = vmatpush1.bf16.msra.mxu0 %v1042
    %1437 = vmatprep.subr.bf16.mxu0 0
    %1438 = vmatpush1.bf16.msra.mxu0 %v1043
    %1439 = vmatprep.subr.bf16.mxu0 0
    %1440 = vmatpush1.bf16.msra.mxu0 %v1044
    %1441 = vmatprep.subr.bf16.mxu0 0
    %1442 = vmatpush1.bf16.msra.mxu0 %v1045
    %1443 = vmatprep.subr.bf16.mxu0 0
    %1444 = vmatpush1.bf16.msra.mxu0 %v1046
    %1445 = vmatprep.subr.bf16.mxu0 0
    %1446 = vmatpush1.bf16.msra.mxu0 %v1047
    %1447 = vmatprep.subr.bf16.mxu0 0
    %1448 = vmatpush1.bf16.msra.mxu0 %v1048
    %1449 = vmatprep.subr.bf16.mxu0 0
    %1450 = vmatpush1.bf16.msra.mxu0 %v1049
    %1451 = vmatprep.subr.bf16.mxu0 0
    %1452 = vmatpush1.bf16.msra.mxu0 %v1050
    %1453 = vmatprep.subr.bf16.mxu0 0
    %1454 = vmatpush1.bf16.msra.mxu0 %v1051
    %1455 = vmatprep.subr.bf16.mxu0 0
    %1456 = vmatpush1.bf16.msra.mxu0 %v1052
    %1457 = vmatprep.mubr.bf16.mxu0 %v406
    %1458 = vmatmul.mubr.bf16.gmra.mrb[0].mxu0 %v405
    %v1459 = vpop.f32.mrb[0].mxu0
    %v1460 = vadd.f32 %v1411, %v1459
    %v1461 = vpop.f32.mrb[0].mxu0
    %v1462 = vpop.f32.mrb[0].mxu0
    %v1463 = vadd.f32 %v1414, %v1462
    %v1464 = vpop.f32.mrb[0].mxu0
    %1465 = vmatprep.mubr.bf16.mxu0 %v422
    %1466 = vmatmul.mubr.bf16.gmra.mrb[0].mxu0 %v421
    %v1467 = vpop.f32.mrb[0].mxu0
    %v1468 = vadd.f32 %v1419, %v1467
    %v1469 = vpop.f32.mrb[0].mxu0
    %v1470 = vpop.f32.mrb[0].mxu0
    %v1471 = vadd.f32 %v1422, %v1470
    %v1472 = vpop.f32.mrb[0].mxu0
    %1473 = vdwg.mxu0
    %1474 = vmatprep.subr.bf16.mxu0 0
    %1475 = vmatpush1.bf16.msra.mxu0 %v1053
    %1476 = vmatprep.subr.bf16.mxu0 0
    %1477 = vmatpush1.bf16.msra.mxu0 %v1054
    %1478 = vmatprep.subr.bf16.mxu0 0
    %1479 = vmatpush1.bf16.msra.mxu0 %v1055
    %1480 = vmatprep.subr.bf16.mxu0 0
    %1481 = vmatpush1.bf16.msra.mxu0 %v1056
    %1482 = vmatprep.subr.bf16.mxu0 0
    %1483 = vmatpush1.bf16.msra.mxu0 %v1057
    %1484 = vmatprep.subr.bf16.mxu0 0
    %1485 = vmatpush1.bf16.msra.mxu0 %v1058
    %1486 = vmatprep.subr.bf16.mxu0 0
    %1487 = vmatpush1.bf16.msra.mxu0 %v1059
    %1488 = vmatprep.subr.bf16.mxu0 0
    %1489 = vmatpush1.bf16.msra.mxu0 %v1060
    %1490 = vmatprep.subr.bf16.mxu0 0
    %1491 = vmatpush1.bf16.msra.mxu0 %v1061
    %1492 = vmatprep.subr.bf16.mxu0 0
    %1493 = vmatpush1.bf16.msra.mxu0 %v1062
    %1494 = vmatprep.subr.bf16.mxu0 0
    %1495 = vmatpush1.bf16.msra.mxu0 %v1063
    %1496 = vmatprep.subr.bf16.mxu0 0
    %1497 = vmatpush1.bf16.msra.mxu0 %v1064
    %1498 = vmatprep.subr.bf16.mxu0 0
    %1499 = vmatpush1.bf16.msra.mxu0 %v1065
    %1500 = vmatprep.subr.bf16.mxu0 0
    %1501 = vmatpush1.bf16.msra.mxu0 %v1066
    %1502 = vmatprep.subr.bf16.mxu0 0
    %1503 = vmatpush1.bf16.msra.mxu0 %v1067
    %1504 = vmatprep.subr.bf16.mxu0 0
    %1505 = vmatpush1.bf16.msra.mxu0 %v1068
    %1506 = vmatprep.mubr.bf16.mxu0 %v408
    %1507 = vmatmul.mubr.bf16.gmra.mrb[0].mxu0 %v407
    %v1508 = vpop.f32.mrb[0].mxu0
    %v1509 = vadd.f32 %v1460, %v1508
    %v1510 = vpop.f32.mrb[0].mxu0
    %v1511 = vpop.f32.mrb[0].mxu0
    %v1512 = vadd.f32 %v1463, %v1511
    %v1513 = vpop.f32.mrb[0].mxu0
    %1514 = vmatprep.mubr.bf16.mxu0 %v424
    %1515 = vmatmul.mubr.bf16.gmra.mrb[0].mxu0 %v423
    %v1516 = vpop.f32.mrb[0].mxu0
    %v1517 = vadd.f32 %v1468, %v1516
    %v1518 = vpop.f32.mrb[0].mxu0
    %v1519 = vpop.f32.mrb[0].mxu0
    %v1520 = vadd.f32 %v1471, %v1519
    %v1521 = vpop.f32.mrb[0].mxu0
    %1522 = vdwg.mxu0
    %1523 = vmatprep.subr.bf16.mxu0 0
    %1524 = vmatpush1.bf16.msra.mxu0 %v1069
    %1525 = vmatprep.subr.bf16.mxu0 0
    %1526 = vmatpush1.bf16.msra.mxu0 %v1070
    %1527 = vmatprep.subr.bf16.mxu0 0
    %1528 = vmatpush1.bf16.msra.mxu0 %v1071
    %1529 = vmatprep.subr.bf16.mxu0 0
    %1530 = vmatpush1.bf16.msra.mxu0 %v1072
    %1531 = vmatprep.subr.bf16.mxu0 0
    %1532 = vmatpush1.bf16.msra.mxu0 %v1073
    %1533 = vmatprep.subr.bf16.mxu0 0
    %1534 = vmatpush1.bf16.msra.mxu0 %v1074
    %1535 = vmatprep.subr.bf16.mxu0 0
    %1536 = vmatpush1.bf16.msra.mxu0 %v1075
    %1537 = vmatprep.subr.bf16.mxu0 0
    %1538 = vmatpush1.bf16.msra.mxu0 %v1076
    %1539 = vmatprep.subr.bf16.mxu0 0
    %1540 = vmatpush1.bf16.msra.mxu0 %v1077
    %1541 = vmatprep.subr.bf16.mxu0 0
    %1542 = vmatpush1.bf16.msra.mxu0 %v1078
    %1543 = vmatprep.subr.bf16.mxu0 0
    %1544 = vmatpush1.bf16.msra.mxu0 %v1079
    %1545 = vmatprep.subr.bf16.mxu0 0
    %1546 = vmatpush1.bf16.msra.mxu0 %v1080
    %1547 = vmatprep.subr.bf16.mxu0 0
    %1548 = vmatpush1.bf16.msra.mxu0 %v1081
    %1549 = vmatprep.subr.bf16.mxu0 0
    %1550 = vmatpush1.bf16.msra.mxu0 %v1082
    %1551 = vmatprep.subr.bf16.mxu0 0
    %1552 = vmatpush1.bf16.msra.mxu0 %v1083
    %1553 = vmatprep.subr.bf16.mxu0 0
    %1554 = vmatpush1.bf16.msra.mxu0 %v1084
    %1555 = vmatprep.mubr.bf16.mxu0 %v410
    %1556 = vmatmul.mubr.bf16.gmra.mrb[0].mxu0 %v409
    %v1557 = vpop.f32.mrb[0].mxu0
    %v1558 = vadd.f32 %v1509, %v1557
    %v1559 = vpop.f32.mrb[0].mxu0
    %v1560 = vpop.f32.mrb[0].mxu0
    %v1561 = vadd.f32 %v1512, %v1560
    %v1562 = vpop.f32.mrb[0].mxu0
    %1563 = vmatprep.mubr.bf16.mxu0 %v426
    %1564 = vmatmul.mubr.bf16.gmra.mrb[0].mxu0 %v425
    %v1565 = vpop.f32.mrb[0].mxu0
    %v1566 = vadd.f32 %v1517, %v1565
    %v1567 = vpop.f32.mrb[0].mxu0
    %v1568 = vpop.f32.mrb[0].mxu0
    %v1569 = vadd.f32 %v1520, %v1568
    %v1570 = vpop.f32.mrb[0].mxu0
    %1571 = vdwg.mxu0
    %1572 = vmatprep.subr.bf16.mxu0 0
    %1573 = vmatpush1.bf16.msra.mxu0 %v1085
    %1574 = vmatprep.subr.bf16.mxu0 0
    %1575 = vmatpush1.bf16.msra.mxu0 %v1086
    %1576 = vmatprep.subr.bf16.mxu0 0
    %1577 = vmatpush1.bf16.msra.mxu0 %v1087
    %1578 = vmatprep.subr.bf16.mxu0 0
    %1579 = vmatpush1.bf16.msra.mxu0 %v1088
    %1580 = vmatprep.subr.bf16.mxu0 0
    %1581 = vmatpush1.bf16.msra.mxu0 %v1089
    %1582 = vmatprep.subr.bf16.mxu0 0
    %1583 = vmatpush1.bf16.msra.mxu0 %v1090
    %1584 = vmatprep.subr.bf16.mxu0 0
    %1585 = vmatpush1.bf16.msra.mxu0 %v1091
    %1586 = vmatprep.subr.bf16.mxu0 0
    %1587 = vmatpush1.bf16.msra.mxu0 %v1092
    %1588 = vmatprep.subr.bf16.mxu0 0
    %1589 = vmatpush1.bf16.msra.mxu0 %v1093
    %1590 = vmatprep.subr.bf16.mxu0 0
    %1591 = vmatpush1.bf16.msra.mxu0 %v1094
    %1592 = vmatprep.subr.bf16.mxu0 0
    %1593 = vmatpush1.bf16.msra.mxu0 %v1095
    %1594 = vmatprep.subr.bf16.mxu0 0
    %1595 = vmatpush1.bf16.msra.mxu0 %v1096
    %1596 = vmatprep.subr.bf16.mxu0 0
    %1597 = vmatpush1.bf16.msra.mxu0 %v1097
    %1598 = vmatprep.subr.bf16.mxu0 0
    %1599 = vmatpush1.bf16.msra.mxu0 %v1098
    %1600 = vmatprep.subr.bf16.mxu0 0
    %1601 = vmatpush1.bf16.msra.mxu0 %v1099
    %1602 = vmatprep.subr.bf16.mxu0 0
    %1603 = vmatpush1.bf16.msra.mxu0 %v1100
    %1604 = vmatprep.mubr.bf16.mxu0 %v412
    %1605 = vmatmul.mubr.bf16.gmra.mrb[0].mxu0 %v411
    %v1606 = vpop.f32.mrb[0].mxu0
    %v1607 = vadd.f32 %v1558, %v1606
    %v1608 = vpop.f32.mrb[0].mxu0
    %v1609 = vpop.f32.mrb[0].mxu0
    %v1610 = vadd.f32 %v1561, %v1609
    %v1611 = vpop.f32.mrb[0].mxu0
    %1612 = vmatprep.mubr.bf16.mxu0 %v428
    %1613 = vmatmul.mubr.bf16.gmra.mrb[0].mxu0 %v427
    %v1614 = vpop.f32.mrb[0].mxu0
    %v1615 = vadd.f32 %v1566, %v1614
    %v1616 = vpop.f32.mrb[0].mxu0
    %v1617 = vpop.f32.mrb[0].mxu0
    %v1618 = vadd.f32 %v1569, %v1617
    %v1619 = vpop.f32.mrb[0].mxu0
    %1620 = vdwg.mxu0
    %s1621 = scalar_lea.vmem %s0, 1024
    %v1622 = vld [vmem:[%s1621] sm:$0xf]
    %v1623 = vld [vmem:[%s1621 + $0x4] sm:$0xf]
    %v1624 = vld [vmem:[%s1621 + $0x8] sm:$0xf]
    %v1625 = vld [vmem:[%s1621 + $0xc] sm:$0xf]
    %v1626 = vld [vmem:[%s1621 + $0x10] sm:$0xf]
    %v1627 = vld [vmem:[%s1621 + $0x14] sm:$0xf]
    %v1628 = vld [vmem:[%s1621 + $0x18] sm:$0xf]
    %v1629 = vld [vmem:[%s1621 + $0x1c] sm:$0xf]
    %v1630 = vld [vmem:[%s1621 + $0x20] sm:$0xf]
    %v1631 = vld [vmem:[%s1621 + $0x24] sm:$0xf]
    %v1632 = vld [vmem:[%s1621 + $0x28] sm:$0xf]
    %v1633 = vld [vmem:[%s1621 + $0x2c] sm:$0xf]
    %v1634 = vld [vmem:[%s1621 + $0x30] sm:$0xf]
    %v1635 = vld [vmem:[%s1621 + $0x34] sm:$0xf]
    %v1636 = vld [vmem:[%s1621 + $0x38] sm:$0xf]
    %v1637 = vld [vmem:[%s1621 + $0x3c] sm:$0xf]
    %v1638 = vld [vmem:[%s1621 + $0x40] sm:$0xf]
    %v1639 = vld [vmem:[%s1621 + $0x44] sm:$0xf]
    %v1640 = vld [vmem:[%s1621 + $0x48] sm:$0xf]
    %v1641 = vld [vmem:[%s1621 + $0x4c] sm:$0xf]
    %v1642 = vld [vmem:[%s1621 + $0x50] sm:$0xf]
    %v1643 = vld [vmem:[%s1621 + $0x54] sm:$0xf]
    %v1644 = vld [vmem:[%s1621 + $0x58] sm:$0xf]
    %v1645 = vld [vmem:[%s1621 + $0x5c] sm:$0xf]
    %v1646 = vld [vmem:[%s1621 + $0x60] sm:$0xf]
    %v1647 = vld [vmem:[%s1621 + $0x64] sm:$0xf]
    %v1648 = vld [vmem:[%s1621 + $0x68] sm:$0xf]
    %v1649 = vld [vmem:[%s1621 + $0x6c] sm:$0xf]
    %v1650 = vld [vmem:[%s1621 + $0x70] sm:$0xf]
    %v1651 = vld [vmem:[%s1621 + $0x74] sm:$0xf]
    %v1652 = vld [vmem:[%s1621 + $0x78] sm:$0xf]
    %v1653 = vld [vmem:[%s1621 + $0x7c] sm:$0xf]
    %v1654 = vld [vmem:[%s1621 + $0x80] sm:$0xf]
    %v1655 = vld [vmem:[%s1621 + $0x84] sm:$0xf]
    %v1656 = vld [vmem:[%s1621 + $0x88] sm:$0xf]
    %v1657 = vld [vmem:[%s1621 + $0x8c] sm:$0xf]
    %v1658 = vld [vmem:[%s1621 + $0x90] sm:$0xf]
    %v1659 = vld [vmem:[%s1621 + $0x94] sm:$0xf]
    %v1660 = vld [vmem:[%s1621 + $0x98] sm:$0xf]
    %v1661 = vld [vmem:[%s1621 + $0x9c] sm:$0xf]
    %v1662 = vld [vmem:[%s1621 + $0xa0] sm:$0xf]
    %v1663 = vld [vmem:[%s1621 + $0xa4] sm:$0xf]
    %v1664 = vld [vmem:[%s1621 + $0xa8] sm:$0xf]
    %v1665 = vld [vmem:[%s1621 + $0xac] sm:$0xf]
    %v1666 = vld [vmem:[%s1621 + $0xb0] sm:$0xf]
    %v1667 = vld [vmem:[%s1621 + $0xb4] sm:$0xf]
    %v1668 = vld [vmem:[%s1621 + $0xb8] sm:$0xf]
    %v1669 = vld [vmem:[%s1621 + $0xbc] sm:$0xf]
    %v1670 = vld [vmem:[%s1621 + $0xc0] sm:$0xf]
    %v1671 = vld [vmem:[%s1621 + $0xc4] sm:$0xf]
    %v1672 = vld [vmem:[%s1621 + $0xc8] sm:$0xf]
    %v1673 = vld [vmem:[%s1621 + $0xcc] sm:$0xf]
    %v1674 = vld [vmem:[%s1621 + $0xd0] sm:$0xf]
    %v1675 = vld [vmem:[%s1621 + $0xd4] sm:$0xf]
    %v1676 = vld [vmem:[%s1621 + $0xd8] sm:$0xf]
    %v1677 = vld [vmem:[%s1621 + $0xdc] sm:$0xf]
    %v1678 = vld [vmem:[%s1621 + $0xe0] sm:$0xf]
    %v1679 = vld [vmem:[%s1621 + $0xe4] sm:$0xf]
    %v1680 = vld [vmem:[%s1621 + $0xe8] sm:$0xf]
    %v1681 = vld [vmem:[%s1621 + $0xec] sm:$0xf]
    %v1682 = vld [vmem:[%s1621 + $0xf0] sm:$0xf]
    %v1683 = vld [vmem:[%s1621 + $0xf4] sm:$0xf]
    %v1684 = vld [vmem:[%s1621 + $0xf8] sm:$0xf]
    %v1685 = vld [vmem:[%s1621 + $0xfc] sm:$0xf]
    %v1686 = vld [vmem:[%s1621 + $0x100] sm:$0xf]
    %v1687 = vld [vmem:[%s1621 + $0x104] sm:$0xf]
    %v1688 = vld [vmem:[%s1621 + $0x108] sm:$0xf]
    %v1689 = vld [vmem:[%s1621 + $0x10c] sm:$0xf]
    %v1690 = vld [vmem:[%s1621 + $0x110] sm:$0xf]
    %v1691 = vld [vmem:[%s1621 + $0x114] sm:$0xf]
    %v1692 = vld [vmem:[%s1621 + $0x118] sm:$0xf]
    %v1693 = vld [vmem:[%s1621 + $0x11c] sm:$0xf]
    %v1694 = vld [vmem:[%s1621 + $0x120] sm:$0xf]
    %v1695 = vld [vmem:[%s1621 + $0x124] sm:$0xf]
    %v1696 = vld [vmem:[%s1621 + $0x128] sm:$0xf]
    %v1697 = vld [vmem:[%s1621 + $0x12c] sm:$0xf]
    %v1698 = vld [vmem:[%s1621 + $0x130] sm:$0xf]
    %v1699 = vld [vmem:[%s1621 + $0x134] sm:$0xf]
    %v1700 = vld [vmem:[%s1621 + $0x138] sm:$0xf]
    %v1701 = vld [vmem:[%s1621 + $0x13c] sm:$0xf]
    %v1702 = vld [vmem:[%s1621 + $0x140] sm:$0xf]
    %v1703 = vld [vmem:[%s1621 + $0x144] sm:$0xf]
    %v1704 = vld [vmem:[%s1621 + $0x148] sm:$0xf]
    %v1705 = vld [vmem:[%s1621 + $0x14c] sm:$0xf]
    %v1706 = vld [vmem:[%s1621 + $0x150] sm:$0xf]
    %v1707 = vld [vmem:[%s1621 + $0x154] sm:$0xf]
    %v1708 = vld [vmem:[%s1621 + $0x158] sm:$0xf]
    %v1709 = vld [vmem:[%s1621 + $0x15c] sm:$0xf]
    %v1710 = vld [vmem:[%s1621 + $0x160] sm:$0xf]
    %v1711 = vld [vmem:[%s1621 + $0x164] sm:$0xf]
    %v1712 = vld [vmem:[%s1621 + $0x168] sm:$0xf]
    %v1713 = vld [vmem:[%s1621 + $0x16c] sm:$0xf]
    %v1714 = vld [vmem:[%s1621 + $0x170] sm:$0xf]
    %v1715 = vld [vmem:[%s1621 + $0x174] sm:$0xf]
    %v1716 = vld [vmem:[%s1621 + $0x178] sm:$0xf]
    %v1717 = vld [vmem:[%s1621 + $0x17c] sm:$0xf]
    %v1718 = vld [vmem:[%s1621 + $0x180] sm:$0xf]
    %v1719 = vld [vmem:[%s1621 + $0x184] sm:$0xf]
    %v1720 = vld [vmem:[%s1621 + $0x188] sm:$0xf]
    %v1721 = vld [vmem:[%s1621 + $0x18c] sm:$0xf]
    %v1722 = vld [vmem:[%s1621 + $0x190] sm:$0xf]
    %v1723 = vld [vmem:[%s1621 + $0x194] sm:$0xf]
    %v1724 = vld [vmem:[%s1621 + $0x198] sm:$0xf]
    %v1725 = vld [vmem:[%s1621 + $0x19c] sm:$0xf]
    %v1726 = vld [vmem:[%s1621 + $0x1a0] sm:$0xf]
    %v1727 = vld [vmem:[%s1621 + $0x1a4] sm:$0xf]
    %v1728 = vld [vmem:[%s1621 + $0x1a8] sm:$0xf]
    %v1729 = vld [vmem:[%s1621 + $0x1ac] sm:$0xf]
    %v1730 = vld [vmem:[%s1621 + $0x1b0] sm:$0xf]
    %v1731 = vld [vmem:[%s1621 + $0x1b4] sm:$0xf]
    %v1732 = vld [vmem:[%s1621 + $0x1b8] sm:$0xf]
    %v1733 = vld [vmem:[%s1621 + $0x1bc] sm:$0xf]
    %v1734 = vld [vmem:[%s1621 + $0x1c0] sm:$0xf]
    %v1735 = vld [vmem:[%s1621 + $0x1c4] sm:$0xf]
    %v1736 = vld [vmem:[%s1621 + $0x1c8] sm:$0xf]
    %v1737 = vld [vmem:[%s1621 + $0x1cc] sm:$0xf]
    %v1738 = vld [vmem:[%s1621 + $0x1d0] sm:$0xf]
    %v1739 = vld [vmem:[%s1621 + $0x1d4] sm:$0xf]
    %v1740 = vld [vmem:[%s1621 + $0x1d8] sm:$0xf]
    %v1741 = vld [vmem:[%s1621 + $0x1dc] sm:$0xf]
    %v1742 = vld [vmem:[%s1621 + $0x1e0] sm:$0xf]
    %v1743 = vld [vmem:[%s1621 + $0x1e4] sm:$0xf]
    %v1744 = vld [vmem:[%s1621 + $0x1e8] sm:$0xf]
    %v1745 = vld [vmem:[%s1621 + $0x1ec] sm:$0xf]
    %v1746 = vld [vmem:[%s1621 + $0x1f0] sm:$0xf]
    %v1747 = vld [vmem:[%s1621 + $0x1f4] sm:$0xf]
    %v1748 = vld [vmem:[%s1621 + $0x1f8] sm:$0xf]
    %v1749 = vld [vmem:[%s1621 + $0x1fc] sm:$0xf]
    %v1750 = vld [vmem:[%s1621 + $0x200] sm:$0xf]
    %v1751 = vld [vmem:[%s1621 + $0x204] sm:$0xf]
    %v1752 = vld [vmem:[%s1621 + $0x208] sm:$0xf]
    %v1753 = vld [vmem:[%s1621 + $0x20c] sm:$0xf]
    %v1754 = vld [vmem:[%s1621 + $0x210] sm:$0xf]
    %v1755 = vld [vmem:[%s1621 + $0x214] sm:$0xf]
    %v1756 = vld [vmem:[%s1621 + $0x218] sm:$0xf]
    %v1757 = vld [vmem:[%s1621 + $0x21c] sm:$0xf]
    %v1758 = vld [vmem:[%s1621 + $0x220] sm:$0xf]
    %v1759 = vld [vmem:[%s1621 + $0x224] sm:$0xf]
    %v1760 = vld [vmem:[%s1621 + $0x228] sm:$0xf]
    %v1761 = vld [vmem:[%s1621 + $0x22c] sm:$0xf]
    %v1762 = vld [vmem:[%s1621 + $0x230] sm:$0xf]
    %v1763 = vld [vmem:[%s1621 + $0x234] sm:$0xf]
    %v1764 = vld [vmem:[%s1621 + $0x238] sm:$0xf]
    %v1765 = vld [vmem:[%s1621 + $0x23c] sm:$0xf]
    %v1766 = vld [vmem:[%s1621 + $0x240] sm:$0xf]
    %v1767 = vld [vmem:[%s1621 + $0x244] sm:$0xf]
    %v1768 = vld [vmem:[%s1621 + $0x248] sm:$0xf]
    %v1769 = vld [vmem:[%s1621 + $0x24c] sm:$0xf]
    %v1770 = vld [vmem:[%s1621 + $0x250] sm:$0xf]
    %v1771 = vld [vmem:[%s1621 + $0x254] sm:$0xf]
    %v1772 = vld [vmem:[%s1621 + $0x258] sm:$0xf]
    %v1773 = vld [vmem:[%s1621 + $0x25c] sm:$0xf]
    %v1774 = vld [vmem:[%s1621 + $0x260] sm:$0xf]
    %v1775 = vld [vmem:[%s1621 + $0x264] sm:$0xf]
    %v1776 = vld [vmem:[%s1621 + $0x268] sm:$0xf]
    %v1777 = vld [vmem:[%s1621 + $0x26c] sm:$0xf]
    %v1778 = vld [vmem:[%s1621 + $0x270] sm:$0xf]
    %v1779 = vld [vmem:[%s1621 + $0x274] sm:$0xf]
    %v1780 = vld [vmem:[%s1621 + $0x278] sm:$0xf]
    %v1781 = vld [vmem:[%s1621 + $0x27c] sm:$0xf]
    %v1782 = vld [vmem:[%s1621 + $0x280] sm:$0xf]
    %v1783 = vld [vmem:[%s1621 + $0x284] sm:$0xf]
    %v1784 = vld [vmem:[%s1621 + $0x288] sm:$0xf]
    %v1785 = vld [vmem:[%s1621 + $0x28c] sm:$0xf]
    %v1786 = vld [vmem:[%s1621 + $0x290] sm:$0xf]
    %v1787 = vld [vmem:[%s1621 + $0x294] sm:$0xf]
    %v1788 = vld [vmem:[%s1621 + $0x298] sm:$0xf]
    %v1789 = vld [vmem:[%s1621 + $0x29c] sm:$0xf]
    %v1790 = vld [vmem:[%s1621 + $0x2a0] sm:$0xf]
    %v1791 = vld [vmem:[%s1621 + $0x2a4] sm:$0xf]
    %v1792 = vld [vmem:[%s1621 + $0x2a8] sm:$0xf]
    %v1793 = vld [vmem:[%s1621 + $0x2ac] sm:$0xf]
    %v1794 = vld [vmem:[%s1621 + $0x2b0] sm:$0xf]
    %v1795 = vld [vmem:[%s1621 + $0x2b4] sm:$0xf]
    %v1796 = vld [vmem:[%s1621 + $0x2b8] sm:$0xf]
    %v1797 = vld [vmem:[%s1621 + $0x2bc] sm:$0xf]
    %v1798 = vld [vmem:[%s1621 + $0x2c0] sm:$0xf]
    %v1799 = vld [vmem:[%s1621 + $0x2c4] sm:$0xf]
    %v1800 = vld [vmem:[%s1621 + $0x2c8] sm:$0xf]
    %v1801 = vld [vmem:[%s1621 + $0x2cc] sm:$0xf]
    %v1802 = vld [vmem:[%s1621 + $0x2d0] sm:$0xf]
    %v1803 = vld [vmem:[%s1621 + $0x2d4] sm:$0xf]
    %v1804 = vld [vmem:[%s1621 + $0x2d8] sm:$0xf]
    %v1805 = vld [vmem:[%s1621 + $0x2dc] sm:$0xf]
    %v1806 = vld [vmem:[%s1621 + $0x2e0] sm:$0xf]
    %v1807 = vld [vmem:[%s1621 + $0x2e4] sm:$0xf]
    %v1808 = vld [vmem:[%s1621 + $0x2e8] sm:$0xf]
    %v1809 = vld [vmem:[%s1621 + $0x2ec] sm:$0xf]
    %v1810 = vld [vmem:[%s1621 + $0x2f0] sm:$0xf]
    %v1811 = vld [vmem:[%s1621 + $0x2f4] sm:$0xf]
    %v1812 = vld [vmem:[%s1621 + $0x2f8] sm:$0xf]
    %v1813 = vld [vmem:[%s1621 + $0x2fc] sm:$0xf]
    %v1814 = vld [vmem:[%s1621 + $0x300] sm:$0xf]
    %v1815 = vld [vmem:[%s1621 + $0x304] sm:$0xf]
    %v1816 = vld [vmem:[%s1621 + $0x308] sm:$0xf]
    %v1817 = vld [vmem:[%s1621 + $0x30c] sm:$0xf]
    %v1818 = vld [vmem:[%s1621 + $0x310] sm:$0xf]
    %v1819 = vld [vmem:[%s1621 + $0x314] sm:$0xf]
    %v1820 = vld [vmem:[%s1621 + $0x318] sm:$0xf]
    %v1821 = vld [vmem:[%s1621 + $0x31c] sm:$0xf]
    %v1822 = vld [vmem:[%s1621 + $0x320] sm:$0xf]
    %v1823 = vld [vmem:[%s1621 + $0x324] sm:$0xf]
    %v1824 = vld [vmem:[%s1621 + $0x328] sm:$0xf]
    %v1825 = vld [vmem:[%s1621 + $0x32c] sm:$0xf]
    %v1826 = vld [vmem:[%s1621 + $0x330] sm:$0xf]
    %v1827 = vld [vmem:[%s1621 + $0x334] sm:$0xf]
    %v1828 = vld [vmem:[%s1621 + $0x338] sm:$0xf]
    %v1829 = vld [vmem:[%s1621 + $0x33c] sm:$0xf]
    %v1830 = vld [vmem:[%s1621 + $0x340] sm:$0xf]
    %v1831 = vld [vmem:[%s1621 + $0x344] sm:$0xf]
    %v1832 = vld [vmem:[%s1621 + $0x348] sm:$0xf]
    %v1833 = vld [vmem:[%s1621 + $0x34c] sm:$0xf]
    %v1834 = vld [vmem:[%s1621 + $0x350] sm:$0xf]
    %v1835 = vld [vmem:[%s1621 + $0x354] sm:$0xf]
    %v1836 = vld [vmem:[%s1621 + $0x358] sm:$0xf]
    %v1837 = vld [vmem:[%s1621 + $0x35c] sm:$0xf]
    %v1838 = vld [vmem:[%s1621 + $0x360] sm:$0xf]
    %v1839 = vld [vmem:[%s1621 + $0x364] sm:$0xf]
    %v1840 = vld [vmem:[%s1621 + $0x368] sm:$0xf]
    %v1841 = vld [vmem:[%s1621 + $0x36c] sm:$0xf]
    %v1842 = vld [vmem:[%s1621 + $0x370] sm:$0xf]
    %v1843 = vld [vmem:[%s1621 + $0x374] sm:$0xf]
    %v1844 = vld [vmem:[%s1621 + $0x378] sm:$0xf]
    %v1845 = vld [vmem:[%s1621 + $0x37c] sm:$0xf]
    %v1846 = vld [vmem:[%s1621 + $0x380] sm:$0xf]
    %v1847 = vld [vmem:[%s1621 + $0x384] sm:$0xf]
    %v1848 = vld [vmem:[%s1621 + $0x388] sm:$0xf]
    %v1849 = vld [vmem:[%s1621 + $0x38c] sm:$0xf]
    %v1850 = vld [vmem:[%s1621 + $0x390] sm:$0xf]
    %v1851 = vld [vmem:[%s1621 + $0x394] sm:$0xf]
    %v1852 = vld [vmem:[%s1621 + $0x398] sm:$0xf]
    %v1853 = vld [vmem:[%s1621 + $0x39c] sm:$0xf]
    %v1854 = vld [vmem:[%s1621 + $0x3a0] sm:$0xf]
    %v1855 = vld [vmem:[%s1621 + $0x3a4] sm:$0xf]
    %v1856 = vld [vmem:[%s1621 + $0x3a8] sm:$0xf]
    %v1857 = vld [vmem:[%s1621 + $0x3ac] sm:$0xf]
    %v1858 = vld [vmem:[%s1621 + $0x3b0] sm:$0xf]
    %v1859 = vld [vmem:[%s1621 + $0x3b4] sm:$0xf]
    %v1860 = vld [vmem:[%s1621 + $0x3b8] sm:$0xf]
    %v1861 = vld [vmem:[%s1621 + $0x3bc] sm:$0xf]
    %v1862 = vld [vmem:[%s1621 + $0x3c0] sm:$0xf]
    %v1863 = vld [vmem:[%s1621 + $0x3c4] sm:$0xf]
    %v1864 = vld [vmem:[%s1621 + $0x3c8] sm:$0xf]
    %v1865 = vld [vmem:[%s1621 + $0x3cc] sm:$0xf]
    %v1866 = vld [vmem:[%s1621 + $0x3d0] sm:$0xf]
    %v1867 = vld [vmem:[%s1621 + $0x3d4] sm:$0xf]
    %v1868 = vld [vmem:[%s1621 + $0x3d8] sm:$0xf]
    %v1869 = vld [vmem:[%s1621 + $0x3dc] sm:$0xf]
    %v1870 = vld [vmem:[%s1621 + $0x3e0] sm:$0xf]
    %v1871 = vld [vmem:[%s1621 + $0x3e4] sm:$0xf]
    %v1872 = vld [vmem:[%s1621 + $0x3e8] sm:$0xf]
    %v1873 = vld [vmem:[%s1621 + $0x3ec] sm:$0xf]
    %v1874 = vld [vmem:[%s1621 + $0x3f0] sm:$0xf]
    %v1875 = vld [vmem:[%s1621 + $0x3f4] sm:$0xf]
    %v1876 = vld [vmem:[%s1621 + $0x3f8] sm:$0xf]
    %v1877 = vld [vmem:[%s1621 + $0x3fc] sm:$0xf]
    %v2134 = vunpack.c.l.b16 %v1622
    %v2135 = vunpack.c.l.b16 %v1623
    %v2136 = vunpack.c.l.b16 %v1624
    %v2137 = vunpack.c.l.b16 %v1625
    %v2138 = vunpack.c.l.b16 %v1626
    %v2139 = vunpack.c.l.b16 %v1627
    %v2140 = vunpack.c.l.b16 %v1628
    %v2141 = vunpack.c.l.b16 %v1629
    %v2142 = vunpack.c.l.b16 %v1630
    %v2143 = vunpack.c.l.b16 %v1631
    %v2144 = vunpack.c.l.b16 %v1632
    %v2145 = vunpack.c.l.b16 %v1633
    %v2146 = vunpack.c.l.b16 %v1634
    %v2147 = vunpack.c.l.b16 %v1635
    %v2148 = vunpack.c.l.b16 %v1636
    %v2149 = vunpack.c.l.b16 %v1637
    %v2150 = vunpack.c.l.b16 %v1638
    %v2151 = vunpack.c.l.b16 %v1639
    %v2152 = vunpack.c.l.b16 %v1640
    %v2153 = vunpack.c.l.b16 %v1641
    %v2154 = vunpack.c.l.b16 %v1642
    %v2155 = vunpack.c.l.b16 %v1643
    %v2156 = vunpack.c.l.b16 %v1644
    %v2157 = vunpack.c.l.b16 %v1645
    %v2158 = vunpack.c.l.b16 %v1646
    %v2159 = vunpack.c.l.b16 %v1647
    %v2160 = vunpack.c.l.b16 %v1648
    %v2161 = vunpack.c.l.b16 %v1649
    %v2162 = vunpack.c.l.b16 %v1650
    %v2163 = vunpack.c.l.b16 %v1651
    %v2164 = vunpack.c.l.b16 %v1652
    %v2165 = vunpack.c.l.b16 %v1653
    %v2166 = vunpack.c.l.b16 %v1654
    %v2167 = vunpack.c.l.b16 %v1655
    %v2168 = vunpack.c.l.b16 %v1656
    %v2169 = vunpack.c.l.b16 %v1657
    %v2170 = vunpack.c.l.b16 %v1658
    %v2171 = vunpack.c.l.b16 %v1659
    %v2172 = vunpack.c.l.b16 %v1660
    %v2173 = vunpack.c.l.b16 %v1661
    %v2174 = vunpack.c.l.b16 %v1662
    %v2175 = vunpack.c.l.b16 %v1663
    %v2176 = vunpack.c.l.b16 %v1664
    %v2177 = vunpack.c.l.b16 %v1665
    %v2178 = vunpack.c.l.b16 %v1666
    %v2179 = vunpack.c.l.b16 %v1667
    %v2180 = vunpack.c.l.b16 %v1668
    %v2181 = vunpack.c.l.b16 %v1669
    %v2182 = vunpack.c.l.b16 %v1670
    %v2183 = vunpack.c.l.b16 %v1671
    %v2184 = vunpack.c.l.b16 %v1672
    %v2185 = vunpack.c.l.b16 %v1673
    %v2186 = vunpack.c.l.b16 %v1674
    %v2187 = vunpack.c.l.b16 %v1675
    %v2188 = vunpack.c.l.b16 %v1676
    %v2189 = vunpack.c.l.b16 %v1677
    %v2190 = vunpack.c.l.b16 %v1678
    %v2191 = vunpack.c.l.b16 %v1679
    %v2192 = vunpack.c.l.b16 %v1680
    %v2193 = vunpack.c.l.b16 %v1681
    %v2194 = vunpack.c.l.b16 %v1682
    %v2195 = vunpack.c.l.b16 %v1683
    %v2196 = vunpack.c.l.b16 %v1684
    %v2197 = vunpack.c.l.b16 %v1685
    %v2198 = vunpack.c.l.b16 %v1686
    %v2199 = vunpack.c.l.b16 %v1687
    %v2200 = vunpack.c.l.b16 %v1688
    %v2201 = vunpack.c.l.b16 %v1689
    %v2202 = vunpack.c.l.b16 %v1690
    %v2203 = vunpack.c.l.b16 %v1691
    %v2204 = vunpack.c.l.b16 %v1692
    %v2205 = vunpack.c.l.b16 %v1693
    %v2206 = vunpack.c.l.b16 %v1694
    %v2207 = vunpack.c.l.b16 %v1695
    %v2208 = vunpack.c.l.b16 %v1696
    %v2209 = vunpack.c.l.b16 %v1697
    %v2210 = vunpack.c.l.b16 %v1698
    %v2211 = vunpack.c.l.b16 %v1699
    %v2212 = vunpack.c.l.b16 %v1700
    %v2213 = vunpack.c.l.b16 %v1701
    %v2214 = vunpack.c.l.b16 %v1702
    %v2215 = vunpack.c.l.b16 %v1703
    %v2216 = vunpack.c.l.b16 %v1704
    %v2217 = vunpack.c.l.b16 %v1705
    %v2218 = vunpack.c.l.b16 %v1706
    %v2219 = vunpack.c.l.b16 %v1707
    %v2220 = vunpack.c.l.b16 %v1708
    %v2221 = vunpack.c.l.b16 %v1709
    %v2222 = vunpack.c.l.b16 %v1710
    %v2223 = vunpack.c.l.b16 %v1711
    %v2224 = vunpack.c.l.b16 %v1712
    %v2225 = vunpack.c.l.b16 %v1713
    %v2226 = vunpack.c.l.b16 %v1714
    %v2227 = vunpack.c.l.b16 %v1715
    %v2228 = vunpack.c.l.b16 %v1716
    %v2229 = vunpack.c.l.b16 %v1717
    %v2230 = vunpack.c.l.b16 %v1718
    %v2231 = vunpack.c.l.b16 %v1719
    %v2232 = vunpack.c.l.b16 %v1720
    %v2233 = vunpack.c.l.b16 %v1721
    %v2234 = vunpack.c.l.b16 %v1722
    %v2235 = vunpack.c.l.b16 %v1723
    %v2236 = vunpack.c.l.b16 %v1724
    %v2237 = vunpack.c.l.b16 %v1725
    %v2238 = vunpack.c.l.b16 %v1726
    %v2239 = vunpack.c.l.b16 %v1727
    %v2240 = vunpack.c.l.b16 %v1728
    %v2241 = vunpack.c.l.b16 %v1729
    %v2242 = vunpack.c.l.b16 %v1730
    %v2243 = vunpack.c.l.b16 %v1731
    %v2244 = vunpack.c.l.b16 %v1732
    %v2245 = vunpack.c.l.b16 %v1733
    %v2246 = vunpack.c.l.b16 %v1734
    %v2247 = vunpack.c.l.b16 %v1735
    %v2248 = vunpack.c.l.b16 %v1736
    %v2249 = vunpack.c.l.b16 %v1737
    %v2250 = vunpack.c.l.b16 %v1738
    %v2251 = vunpack.c.l.b16 %v1739
    %v2252 = vunpack.c.l.b16 %v1740
    %v2253 = vunpack.c.l.b16 %v1741
    %v2254 = vunpack.c.l.b16 %v1742
    %v2255 = vunpack.c.l.b16 %v1743
    %v2256 = vunpack.c.l.b16 %v1744
    %v2257 = vunpack.c.l.b16 %v1745
    %v2258 = vunpack.c.l.b16 %v1746
    %v2259 = vunpack.c.l.b16 %v1747
    %v2260 = vunpack.c.l.b16 %v1748
    %v2261 = vunpack.c.l.b16 %v1749
    %v2262 = vunpack.c.l.b16 %v1750
    %v2263 = vunpack.c.l.b16 %v1751
    %v2264 = vunpack.c.l.b16 %v1752
    %v2265 = vunpack.c.l.b16 %v1753
    %v2266 = vunpack.c.l.b16 %v1754
    %v2267 = vunpack.c.l.b16 %v1755
    %v2268 = vunpack.c.l.b16 %v1756
    %v2269 = vunpack.c.l.b16 %v1757
    %v2270 = vunpack.c.l.b16 %v1758
    %v2271 = vunpack.c.l.b16 %v1759
    %v2272 = vunpack.c.l.b16 %v1760
    %v2273 = vunpack.c.l.b16 %v1761
    %v2274 = vunpack.c.l.b16 %v1762
    %v2275 = vunpack.c.l.b16 %v1763
    %v2276 = vunpack.c.l.b16 %v1764
    %v2277 = vunpack.c.l.b16 %v1765
    %v2278 = vunpack.c.l.b16 %v1766
    %v2279 = vunpack.c.l.b16 %v1767
    %v2280 = vunpack.c.l.b16 %v1768
    %v2281 = vunpack.c.l.b16 %v1769
    %v2282 = vunpack.c.l.b16 %v1770
    %v2283 = vunpack.c.l.b16 %v1771
    %v2284 = vunpack.c.l.b16 %v1772
    %v2285 = vunpack.c.l.b16 %v1773
    %v2286 = vunpack.c.l.b16 %v1774
    %v2287 = vunpack.c.l.b16 %v1775
    %v2288 = vunpack.c.l.b16 %v1776
    %v2289 = vunpack.c.l.b16 %v1777
    %v2290 = vunpack.c.l.b16 %v1778
    %v2291 = vunpack.c.l.b16 %v1779
    %v2292 = vunpack.c.l.b16 %v1780
    %v2293 = vunpack.c.l.b16 %v1781
    %v2294 = vunpack.c.l.b16 %v1782
    %v2295 = vunpack.c.l.b16 %v1783
    %v2296 = vunpack.c.l.b16 %v1784
    %v2297 = vunpack.c.l.b16 %v1785
    %v2298 = vunpack.c.l.b16 %v1786
    %v2299 = vunpack.c.l.b16 %v1787
    %v2300 = vunpack.c.l.b16 %v1788
    %v2301 = vunpack.c.l.b16 %v1789
    %v2302 = vunpack.c.l.b16 %v1790
    %v2303 = vunpack.c.l.b16 %v1791
    %v2304 = vunpack.c.l.b16 %v1792
    %v2305 = vunpack.c.l.b16 %v1793
    %v2306 = vunpack.c.l.b16 %v1794
    %v2307 = vunpack.c.l.b16 %v1795
    %v2308 = vunpack.c.l.b16 %v1796
    %v2309 = vunpack.c.l.b16 %v1797
    %v2310 = vunpack.c.l.b16 %v1798
    %v2311 = vunpack.c.l.b16 %v1799
    %v2312 = vunpack.c.l.b16 %v1800
    %v2313 = vunpack.c.l.b16 %v1801
    %v2314 = vunpack.c.l.b16 %v1802
    %v2315 = vunpack.c.l.b16 %v1803
    %v2316 = vunpack.c.l.b16 %v1804
    %v2317 = vunpack.c.l.b16 %v1805
    %v2318 = vunpack.c.l.b16 %v1806
    %v2319 = vunpack.c.l.b16 %v1807
    %v2320 = vunpack.c.l.b16 %v1808
    %v2321 = vunpack.c.l.b16 %v1809
    %v2322 = vunpack.c.l.b16 %v1810
    %v2323 = vunpack.c.l.b16 %v1811
    %v2324 = vunpack.c.l.b16 %v1812
    %v2325 = vunpack.c.l.b16 %v1813
    %v2326 = vunpack.c.l.b16 %v1814
    %v2327 = vunpack.c.l.b16 %v1815
    %v2328 = vunpack.c.l.b16 %v1816
    %v2329 = vunpack.c.l.b16 %v1817
    %v2330 = vunpack.c.l.b16 %v1818
    %v2331 = vunpack.c.l.b16 %v1819
    %v2332 = vunpack.c.l.b16 %v1820
    %v2333 = vunpack.c.l.b16 %v1821
    %v2334 = vunpack.c.l.b16 %v1822
    %v2335 = vunpack.c.l.b16 %v1823
    %v2336 = vunpack.c.l.b16 %v1824
    %v2337 = vunpack.c.l.b16 %v1825
    %v2338 = vunpack.c.l.b16 %v1826
    %v2339 = vunpack.c.l.b16 %v1827
    %v2340 = vunpack.c.l.b16 %v1828
    %v2341 = vunpack.c.l.b16 %v1829
    %v2342 = vunpack.c.l.b16 %v1830
    %v2343 = vunpack.c.l.b16 %v1831
    %v2344 = vunpack.c.l.b16 %v1832
    %v2345 = vunpack.c.l.b16 %v1833
    %v2346 = vunpack.c.l.b16 %v1834
    %v2347 = vunpack.c.l.b16 %v1835
    %v2348 = vunpack.c.l.b16 %v1836
    %v2349 = vunpack.c.l.b16 %v1837
    %v2350 = vunpack.c.l.b16 %v1838
    %v2351 = vunpack.c.l.b16 %v1839
    %v2352 = vunpack.c.l.b16 %v1840
    %v2353 = vunpack.c.l.b16 %v1841
    %v2354 = vunpack.c.l.b16 %v1842
    %v2355 = vunpack.c.l.b16 %v1843
    %v2356 = vunpack.c.l.b16 %v1844
    %v2357 = vunpack.c.l.b16 %v1845
    %v2358 = vunpack.c.l.b16 %v1846
    %v2359 = vunpack.c.l.b16 %v1847
    %v2360 = vunpack.c.l.b16 %v1848
    %v2361 = vunpack.c.l.b16 %v1849
    %v2362 = vunpack.c.l.b16 %v1850
    %v2363 = vunpack.c.l.b16 %v1851
    %v2364 = vunpack.c.l.b16 %v1852
    %v2365 = vunpack.c.l.b16 %v1853
    %v2366 = vunpack.c.l.b16 %v1854
    %v2367 = vunpack.c.l.b16 %v1855
    %v2368 = vunpack.c.l.b16 %v1856
    %v2369 = vunpack.c.l.b16 %v1857
    %v2370 = vunpack.c.l.b16 %v1858
    %v2371 = vunpack.c.l.b16 %v1859
    %v2372 = vunpack.c.l.b16 %v1860
    %v2373 = vunpack.c.l.b16 %v1861
    %v2374 = vunpack.c.l.b16 %v1862
    %v2375 = vunpack.c.l.b16 %v1863
    %v2376 = vunpack.c.l.b16 %v1864
    %v2377 = vunpack.c.l.b16 %v1865
    %v2378 = vunpack.c.l.b16 %v1866
    %v2379 = vunpack.c.l.b16 %v1867
    %v2380 = vunpack.c.l.b16 %v1868
    %v2381 = vunpack.c.l.b16 %v1869
    %v2382 = vunpack.c.l.b16 %v1870
    %v2383 = vunpack.c.l.b16 %v1871
    %v2384 = vunpack.c.l.b16 %v1872
    %v2385 = vunpack.c.l.b16 %v1873
    %v2386 = vunpack.c.l.b16 %v1874
    %v2387 = vunpack.c.l.b16 %v1875
    %v2388 = vunpack.c.l.b16 %v1876
    %v2389 = vunpack.c.l.b16 %v1877
    %v2390 = vpack.c.b16 %v2135, %v2134
    %v2391 = vpack.c.b16 %v2137, %v2136
    %v2392 = vpack.c.b16 %v2139, %v2138
    %v2393 = vpack.c.b16 %v2141, %v2140
    %v2394 = vpack.c.b16 %v2143, %v2142
    %v2395 = vpack.c.b16 %v2145, %v2144
    %v2396 = vpack.c.b16 %v2147, %v2146
    %v2397 = vpack.c.b16 %v2149, %v2148
    %v2398 = vpack.c.b16 %v2151, %v2150
    %v2399 = vpack.c.b16 %v2153, %v2152
    %v2400 = vpack.c.b16 %v2155, %v2154
    %v2401 = vpack.c.b16 %v2157, %v2156
    %v2402 = vpack.c.b16 %v2159, %v2158
    %v2403 = vpack.c.b16 %v2161, %v2160
    %v2404 = vpack.c.b16 %v2163, %v2162
    %v2405 = vpack.c.b16 %v2165, %v2164
    %v2406 = vpack.c.b16 %v2167, %v2166
    %v2407 = vpack.c.b16 %v2169, %v2168
    %v2408 = vpack.c.b16 %v2171, %v2170
    %v2409 = vpack.c.b16 %v2173, %v2172
    %v2410 = vpack.c.b16 %v2175, %v2174
    %v2411 = vpack.c.b16 %v2177, %v2176
    %v2412 = vpack.c.b16 %v2179, %v2178
    %v2413 = vpack.c.b16 %v2181, %v2180
    %v2414 = vpack.c.b16 %v2183, %v2182
    %v2415 = vpack.c.b16 %v2185, %v2184
    %v2416 = vpack.c.b16 %v2187, %v2186
    %v2417 = vpack.c.b16 %v2189, %v2188
    %v2418 = vpack.c.b16 %v2191, %v2190
    %v2419 = vpack.c.b16 %v2193, %v2192
    %v2420 = vpack.c.b16 %v2195, %v2194
    %v2421 = vpack.c.b16 %v2197, %v2196
    %v2422 = vpack.c.b16 %v2199, %v2198
    %v2423 = vpack.c.b16 %v2201, %v2200
    %v2424 = vpack.c.b16 %v2203, %v2202
    %v2425 = vpack.c.b16 %v2205, %v2204
    %v2426 = vpack.c.b16 %v2207, %v2206
    %v2427 = vpack.c.b16 %v2209, %v2208
    %v2428 = vpack.c.b16 %v2211, %v2210
    %v2429 = vpack.c.b16 %v2213, %v2212
    %v2430 = vpack.c.b16 %v2215, %v2214
    %v2431 = vpack.c.b16 %v2217, %v2216
    %v2432 = vpack.c.b16 %v2219, %v2218
    %v2433 = vpack.c.b16 %v2221, %v2220
    %v2434 = vpack.c.b16 %v2223, %v2222
    %v2435 = vpack.c.b16 %v2225, %v2224
    %v2436 = vpack.c.b16 %v2227, %v2226
    %v2437 = vpack.c.b16 %v2229, %v2228
    %v2438 = vpack.c.b16 %v2231, %v2230
    %v2439 = vpack.c.b16 %v2233, %v2232
    %v2440 = vpack.c.b16 %v2235, %v2234
    %v2441 = vpack.c.b16 %v2237, %v2236
    %v2442 = vpack.c.b16 %v2239, %v2238
    %v2443 = vpack.c.b16 %v2241, %v2240
    %v2444 = vpack.c.b16 %v2243, %v2242
    %v2445 = vpack.c.b16 %v2245, %v2244
    %v2446 = vpack.c.b16 %v2247, %v2246
    %v2447 = vpack.c.b16 %v2249, %v2248
    %v2448 = vpack.c.b16 %v2251, %v2250
    %v2449 = vpack.c.b16 %v2253, %v2252
    %v2450 = vpack.c.b16 %v2255, %v2254
    %v2451 = vpack.c.b16 %v2257, %v2256
    %v2452 = vpack.c.b16 %v2259, %v2258
    %v2453 = vpack.c.b16 %v2261, %v2260
    %v2454 = vpack.c.b16 %v2263, %v2262
    %v2455 = vpack.c.b16 %v2265, %v2264
    %v2456 = vpack.c.b16 %v2267, %v2266
    %v2457 = vpack.c.b16 %v2269, %v2268
    %v2458 = vpack.c.b16 %v2271, %v2270
    %v2459 = vpack.c.b16 %v2273, %v2272
    %v2460 = vpack.c.b16 %v2275, %v2274
    %v2461 = vpack.c.b16 %v2277, %v2276
    %v2462 = vpack.c.b16 %v2279, %v2278
    %v2463 = vpack.c.b16 %v2281, %v2280
    %v2464 = vpack.c.b16 %v2283, %v2282
    %v2465 = vpack.c.b16 %v2285, %v2284
    %v2466 = vpack.c.b16 %v2287, %v2286
    %v2467 = vpack.c.b16 %v2289, %v2288
    %v2468 = vpack.c.b16 %v2291, %v2290
    %v2469 = vpack.c.b16 %v2293, %v2292
    %v2470 = vpack.c.b16 %v2295, %v2294
    %v2471 = vpack.c.b16 %v2297, %v2296
    %v2472 = vpack.c.b16 %v2299, %v2298
    %v2473 = vpack.c.b16 %v2301, %v2300
    %v2474 = vpack.c.b16 %v2303, %v2302
    %v2475 = vpack.c.b16 %v2305, %v2304
    %v2476 = vpack.c.b16 %v2307, %v2306
    %v2477 = vpack.c.b16 %v2309, %v2308
    %v2478 = vpack.c.b16 %v2311, %v2310
    %v2479 = vpack.c.b16 %v2313, %v2312
    %v2480 = vpack.c.b16 %v2315, %v2314
    %v2481 = vpack.c.b16 %v2317, %v2316
    %v2482 = vpack.c.b16 %v2319, %v2318
    %v2483 = vpack.c.b16 %v2321, %v2320
    %v2484 = vpack.c.b16 %v2323, %v2322
    %v2485 = vpack.c.b16 %v2325, %v2324
    %v2486 = vpack.c.b16 %v2327, %v2326
    %v2487 = vpack.c.b16 %v2329, %v2328
    %v2488 = vpack.c.b16 %v2331, %v2330
    %v2489 = vpack.c.b16 %v2333, %v2332
    %v2490 = vpack.c.b16 %v2335, %v2334
    %v2491 = vpack.c.b16 %v2337, %v2336
    %v2492 = vpack.c.b16 %v2339, %v2338
    %v2493 = vpack.c.b16 %v2341, %v2340
    %v2494 = vpack.c.b16 %v2343, %v2342
    %v2495 = vpack.c.b16 %v2345, %v2344
    %v2496 = vpack.c.b16 %v2347, %v2346
    %v2497 = vpack.c.b16 %v2349, %v2348
    %v2498 = vpack.c.b16 %v2351, %v2350
    %v2499 = vpack.c.b16 %v2353, %v2352
    %v2500 = vpack.c.b16 %v2355, %v2354
    %v2501 = vpack.c.b16 %v2357, %v2356
    %v2502 = vpack.c.b16 %v2359, %v2358
    %v2503 = vpack.c.b16 %v2361, %v2360
    %v2504 = vpack.c.b16 %v2363, %v2362
    %v2505 = vpack.c.b16 %v2365, %v2364
    %v2506 = vpack.c.b16 %v2367, %v2366
    %v2507 = vpack.c.b16 %v2369, %v2368
    %v2508 = vpack.c.b16 %v2371, %v2370
    %v2509 = vpack.c.b16 %v2373, %v2372
    %v2510 = vpack.c.b16 %v2375, %v2374
    %v2511 = vpack.c.b16 %v2377, %v2376
    %v2512 = vpack.c.b16 %v2379, %v2378
    %v2513 = vpack.c.b16 %v2381, %v2380
    %v2514 = vpack.c.b16 %v2383, %v2382
    %v2515 = vpack.c.b16 %v2385, %v2384
    %v2516 = vpack.c.b16 %v2387, %v2386
    %v2517 = vpack.c.b16 %v2389, %v2388
    %2646 = vmatprep.subr.bf16.mxu0 0
    %2647 = vmatpush1.bf16.msra.mxu0 %v2390
    %2648 = vmatprep.subr.bf16.mxu0 0
    %2649 = vmatpush1.bf16.msra.mxu0 %v2391
    %2650 = vmatprep.subr.bf16.mxu0 0
    %2651 = vmatpush1.bf16.msra.mxu0 %v2392
    %2652 = vmatprep.subr.bf16.mxu0 0
    %2653 = vmatpush1.bf16.msra.mxu0 %v2393
    %2654 = vmatprep.subr.bf16.mxu0 0
    %2655 = vmatpush1.bf16.msra.mxu0 %v2394
    %2656 = vmatprep.subr.bf16.mxu0 0
    %2657 = vmatpush1.bf16.msra.mxu0 %v2395
    %2658 = vmatprep.subr.bf16.mxu0 0
    %2659 = vmatpush1.bf16.msra.mxu0 %v2396
    %2660 = vmatprep.subr.bf16.mxu0 0
    %2661 = vmatpush1.bf16.msra.mxu0 %v2397
    %2662 = vmatprep.subr.bf16.mxu0 0
    %2663 = vmatpush1.bf16.msra.mxu0 %v2398
    %2664 = vmatprep.subr.bf16.mxu0 0
    %2665 = vmatpush1.bf16.msra.mxu0 %v2399
    %2666 = vmatprep.subr.bf16.mxu0 0
    %2667 = vmatpush1.bf16.msra.mxu0 %v2400
    %2668 = vmatprep.subr.bf16.mxu0 0
    %2669 = vmatpush1.bf16.msra.mxu0 %v2401
    %2670 = vmatprep.subr.bf16.mxu0 0
    %2671 = vmatpush1.bf16.msra.mxu0 %v2402
    %2672 = vmatprep.subr.bf16.mxu0 0
    %2673 = vmatpush1.bf16.msra.mxu0 %v2403
    %2674 = vmatprep.subr.bf16.mxu0 0
    %2675 = vmatpush1.bf16.msra.mxu0 %v2404
    %2676 = vmatprep.subr.bf16.mxu0 0
    %2677 = vmatpush1.bf16.msra.mxu0 %v2405
    %2678 = vmatprep.mubr.bf16.mxu0 %v398
    %2679 = vmatmul.mubr.bf16.gmra.mrb[0].mxu0 %v397
    %v2680 = vpop.f32.mrb[0].mxu0
    %v2681 = vadd.f32 0.0, %v2680
    %v2682 = vpop.f32.mrb[0].mxu0
    %v2683 = vpop.f32.mrb[0].mxu0
    %v2684 = vadd.f32 0.0, %v2683
    %v2685 = vpop.f32.mrb[0].mxu0
    %2686 = vmatprep.mubr.bf16.mxu0 %v414
    %2687 = vmatmul.mubr.bf16.gmra.mrb[0].mxu0 %v413
    %v2688 = vpop.f32.mrb[0].mxu0
    %v2689 = vadd.f32 0.0, %v2688
    %v2690 = vpop.f32.mrb[0].mxu0
    %v2691 = vpop.f32.mrb[0].mxu0
    %v2692 = vadd.f32 0.0, %v2691
    %v2693 = vpop.f32.mrb[0].mxu0
    %2694 = vdwg.mxu0
    %2695 = vmatprep.subr.bf16.mxu0 0
    %2696 = vmatpush1.bf16.msra.mxu0 %v2406
    %2697 = vmatprep.subr.bf16.mxu0 0
    %2698 = vmatpush1.bf16.msra.mxu0 %v2407
    %2699 = vmatprep.subr.bf16.mxu0 0
    %2700 = vmatpush1.bf16.msra.mxu0 %v2408
    %2701 = vmatprep.subr.bf16.mxu0 0
    %2702 = vmatpush1.bf16.msra.mxu0 %v2409
    %2703 = vmatprep.subr.bf16.mxu0 0
    %2704 = vmatpush1.bf16.msra.mxu0 %v2410
    %2705 = vmatprep.subr.bf16.mxu0 0
    %2706 = vmatpush1.bf16.msra.mxu0 %v2411
    %2707 = vmatprep.subr.bf16.mxu0 0
    %2708 = vmatpush1.bf16.msra.mxu0 %v2412
    %2709 = vmatprep.subr.bf16.mxu0 0
    %2710 = vmatpush1.bf16.msra.mxu0 %v2413
    %2711 = vmatprep.subr.bf16.mxu0 0
    %2712 = vmatpush1.bf16.msra.mxu0 %v2414
    %2713 = vmatprep.subr.bf16.mxu0 0
    %2714 = vmatpush1.bf16.msra.mxu0 %v2415
    %2715 = vmatprep.subr.bf16.mxu0 0
    %2716 = vmatpush1.bf16.msra.mxu0 %v2416
    %2717 = vmatprep.subr.bf16.mxu0 0
    %2718 = vmatpush1.bf16.msra.mxu0 %v2417
    %2719 = vmatprep.subr.bf16.mxu0 0
    %2720 = vmatpush1.bf16.msra.mxu0 %v2418
    %2721 = vmatprep.subr.bf16.mxu0 0
    %2722 = vmatpush1.bf16.msra.mxu0 %v2419
    %2723 = vmatprep.subr.bf16.mxu0 0
    %2724 = vmatpush1.bf16.msra.mxu0 %v2420
    %2725 = vmatprep.subr.bf16.mxu0 0
    %2726 = vmatpush1.bf16.msra.mxu0 %v2421
    %2727 = vmatprep.mubr.bf16.mxu0 %v400
    %2728 = vmatmul.mubr.bf16.gmra.mrb[0].mxu0 %v399
    %v2729 = vpop.f32.mrb[0].mxu0
    %v2730 = vadd.f32 %v2681, %v2729
    %v2731 = vpop.f32.mrb[0].mxu0
    %v2732 = vpop.f32.mrb[0].mxu0
    %v2733 = vadd.f32 %v2684, %v2732
    %v2734 = vpop.f32.mrb[0].mxu0
    %2735 = vmatprep.mubr.bf16.mxu0 %v416
    %2736 = vmatmul.mubr.bf16.gmra.mrb[0].mxu0 %v415
    %v2737 = vpop.f32.mrb[0].mxu0
    %v2738 = vadd.f32 %v2689, %v2737
    %v2739 = vpop.f32.mrb[0].mxu0
    %v2740 = vpop.f32.mrb[0].mxu0
    %v2741 = vadd.f32 %v2692, %v2740
    %v2742 = vpop.f32.mrb[0].mxu0
    %2743 = vdwg.mxu0
    %2744 = vmatprep.subr.bf16.mxu0 0
    %2745 = vmatpush1.bf16.msra.mxu0 %v2422
    %2746 = vmatprep.subr.bf16.mxu0 0
    %2747 = vmatpush1.bf16.msra.mxu0 %v2423
    %2748 = vmatprep.subr.bf16.mxu0 0
    %2749 = vmatpush1.bf16.msra.mxu0 %v2424
    %2750 = vmatprep.subr.bf16.mxu0 0
    %2751 = vmatpush1.bf16.msra.mxu0 %v2425
    %2752 = vmatprep.subr.bf16.mxu0 0
    %2753 = vmatpush1.bf16.msra.mxu0 %v2426
    %2754 = vmatprep.subr.bf16.mxu0 0
    %2755 = vmatpush1.bf16.msra.mxu0 %v2427
    %2756 = vmatprep.subr.bf16.mxu0 0
    %2757 = vmatpush1.bf16.msra.mxu0 %v2428
    %2758 = vmatprep.subr.bf16.mxu0 0
    %2759 = vmatpush1.bf16.msra.mxu0 %v2429
    %2760 = vmatprep.subr.bf16.mxu0 0
    %2761 = vmatpush1.bf16.msra.mxu0 %v2430
    %2762 = vmatprep.subr.bf16.mxu0 0
    %2763 = vmatpush1.bf16.msra.mxu0 %v2431
    %2764 = vmatprep.subr.bf16.mxu0 0
    %2765 = vmatpush1.bf16.msra.mxu0 %v2432
    %2766 = vmatprep.subr.bf16.mxu0 0
    %2767 = vmatpush1.bf16.msra.mxu0 %v2433
    %2768 = vmatprep.subr.bf16.mxu0 0
    %2769 = vmatpush1.bf16.msra.mxu0 %v2434
    %2770 = vmatprep.subr.bf16.mxu0 0
    %2771 = vmatpush1.bf16.msra.mxu0 %v2435
    %2772 = vmatprep.subr.bf16.mxu0 0
    %2773 = vmatpush1.bf16.msra.mxu0 %v2436
    %2774 = vmatprep.subr.bf16.mxu0 0
    %2775 = vmatpush1.bf16.msra.mxu0 %v2437
    %2776 = vmatprep.mubr.bf16.mxu0 %v402
    %2777 = vmatmul.mubr.bf16.gmra.mrb[0].mxu0 %v401
    %v2778 = vpop.f32.mrb[0].mxu0
    %v2779 = vadd.f32 %v2730, %v2778
    %v2780 = vpop.f32.mrb[0].mxu0
    %v2781 = vpop.f32.mrb[0].mxu0
    %v2782 = vadd.f32 %v2733, %v2781
    %v2783 = vpop.f32.mrb[0].mxu0
    %2784 = vmatprep.mubr.bf16.mxu0 %v418
    %2785 = vmatmul.mubr.bf16.gmra.mrb[0].mxu0 %v417
    %v2786 = vpop.f32.mrb[0].mxu0
    %v2787 = vadd.f32 %v2738, %v2786
    %v2788 = vpop.f32.mrb[0].mxu0
    %v2789 = vpop.f32.mrb[0].mxu0
    %v2790 = vadd.f32 %v2741, %v2789
    %v2791 = vpop.f32.mrb[0].mxu0
    %2792 = vdwg.mxu0
    %2793 = vmatprep.subr.bf16.mxu0 0
    %2794 = vmatpush1.bf16.msra.mxu0 %v2438
    %2795 = vmatprep.subr.bf16.mxu0 0
    %2796 = vmatpush1.bf16.msra.mxu0 %v2439
    %2797 = vmatprep.subr.bf16.mxu0 0
    %2798 = vmatpush1.bf16.msra.mxu0 %v2440
    %2799 = vmatprep.subr.bf16.mxu0 0
    %2800 = vmatpush1.bf16.msra.mxu0 %v2441
    %2801 = vmatprep.subr.bf16.mxu0 0
    %2802 = vmatpush1.bf16.msra.mxu0 %v2442
    %2803 = vmatprep.subr.bf16.mxu0 0
    %2804 = vmatpush1.bf16.msra.mxu0 %v2443
    %2805 = vmatprep.subr.bf16.mxu0 0
    %2806 = vmatpush1.bf16.msra.mxu0 %v2444
    %2807 = vmatprep.subr.bf16.mxu0 0
    %2808 = vmatpush1.bf16.msra.mxu0 %v2445
    %2809 = vmatprep.subr.bf16.mxu0 0
    %2810 = vmatpush1.bf16.msra.mxu0 %v2446
    %2811 = vmatprep.subr.bf16.mxu0 0
    %2812 = vmatpush1.bf16.msra.mxu0 %v2447
    %2813 = vmatprep.subr.bf16.mxu0 0
    %2814 = vmatpush1.bf16.msra.mxu0 %v2448
    %2815 = vmatprep.subr.bf16.mxu0 0
    %2816 = vmatpush1.bf16.msra.mxu0 %v2449
    %2817 = vmatprep.subr.bf16.mxu0 0
    %2818 = vmatpush1.bf16.msra.mxu0 %v2450
    %2819 = vmatprep.subr.bf16.mxu0 0
    %2820 = vmatpush1.bf16.msra.mxu0 %v2451
    %2821 = vmatprep.subr.bf16.mxu0 0
    %2822 = vmatpush1.bf16.msra.mxu0 %v2452
    %2823 = vmatprep.subr.bf16.mxu0 0
    %2824 = vmatpush1.bf16.msra.mxu0 %v2453
    %2825 = vmatprep.mubr.bf16.mxu0 %v404
    %2826 = vmatmul.mubr.bf16.gmra.mrb[0].mxu0 %v403
    %v2827 = vpop.f32.mrb[0].mxu0
    %v2828 = vadd.f32 %v2779, %v2827
    %v2829 = vpop.f32.mrb[0].mxu0
    %v2830 = vpop.f32.mrb[0].mxu0
    %v2831 = vadd.f32 %v2782, %v2830
    %v2832 = vpop.f32.mrb[0].mxu0
    %2833 = vmatprep.mubr.bf16.mxu0 %v420
    %2834 = vmatmul.mubr.bf16.gmra.mrb[0].mxu0 %v419
    %v2835 = vpop.f32.mrb[0].mxu0
    %v2836 = vadd.f32 %v2787, %v2835
    %v2837 = vpop.f32.mrb[0].mxu0
    %v2838 = vpop.f32.mrb[0].mxu0
    %v2839 = vadd.f32 %v2790, %v2838
    %v2840 = vpop.f32.mrb[0].mxu0
    %2841 = vdwg.mxu0
    %2842 = vmatprep.subr.bf16.mxu0 0
    %2843 = vmatpush1.bf16.msra.mxu0 %v2454
    %2844 = vmatprep.subr.bf16.mxu0 0
    %2845 = vmatpush1.bf16.msra.mxu0 %v2455
    %2846 = vmatprep.subr.bf16.mxu0 0
    %2847 = vmatpush1.bf16.msra.mxu0 %v2456
    %2848 = vmatprep.subr.bf16.mxu0 0
    %2849 = vmatpush1.bf16.msra.mxu0 %v2457
    %2850 = vmatprep.subr.bf16.mxu0 0
    %2851 = vmatpush1.bf16.msra.mxu0 %v2458
    %2852 = vmatprep.subr.bf16.mxu0 0
    %2853 = vmatpush1.bf16.msra.mxu0 %v2459
    %2854 = vmatprep.subr.bf16.mxu0 0
    %2855 = vmatpush1.bf16.msra.mxu0 %v2460
    %2856 = vmatprep.subr.bf16.mxu0 0
    %2857 = vmatpush1.bf16.msra.mxu0 %v2461
    %2858 = vmatprep.subr.bf16.mxu0 0
    %2859 = vmatpush1.bf16.msra.mxu0 %v2462
    %2860 = vmatprep.subr.bf16.mxu0 0
    %2861 = vmatpush1.bf16.msra.mxu0 %v2463
    %2862 = vmatprep.subr.bf16.mxu0 0
    %2863 = vmatpush1.bf16.msra.mxu0 %v2464
    %2864 = vmatprep.subr.bf16.mxu0 0
    %2865 = vmatpush1.bf16.msra.mxu0 %v2465
    %2866 = vmatprep.subr.bf16.mxu0 0
    %2867 = vmatpush1.bf16.msra.mxu0 %v2466
    %2868 = vmatprep.subr.bf16.mxu0 0
    %2869 = vmatpush1.bf16.msra.mxu0 %v2467
    %2870 = vmatprep.subr.bf16.mxu0 0
    %2871 = vmatpush1.bf16.msra.mxu0 %v2468
    %2872 = vmatprep.subr.bf16.mxu0 0
    %2873 = vmatpush1.bf16.msra.mxu0 %v2469
    %2874 = vmatprep.mubr.bf16.mxu0 %v406
    %2875 = vmatmul.mubr.bf16.gmra.mrb[0].mxu0 %v405
    %v2876 = vpop.f32.mrb[0].mxu0
    %v2877 = vadd.f32 %v2828, %v2876
    %v2878 = vpop.f32.mrb[0].mxu0
    %v2879 = vpop.f32.mrb[0].mxu0
    %v2880 = vadd.f32 %v2831, %v2879
    %v2881 = vpop.f32.mrb[0].mxu0
    %2882 = vmatprep.mubr.bf16.mxu0 %v422
    %2883 = vmatmul.mubr.bf16.gmra.mrb[0].mxu0 %v421
    %v2884 = vpop.f32.mrb[0].mxu0
    %v2885 = vadd.f32 %v2836, %v2884
    %v2886 = vpop.f32.mrb[0].mxu0
    %v2887 = vpop.f32.mrb[0].mxu0
    %v2888 = vadd.f32 %v2839, %v2887
    %v2889 = vpop.f32.mrb[0].mxu0
    %2890 = vdwg.mxu0
    %2891 = vmatprep.subr.bf16.mxu0 0
    %2892 = vmatpush1.bf16.msra.mxu0 %v2470
    %2893 = vmatprep.subr.bf16.mxu0 0
    %2894 = vmatpush1.bf16.msra.mxu0 %v2471
    %2895 = vmatprep.subr.bf16.mxu0 0
    %2896 = vmatpush1.bf16.msra.mxu0 %v2472
    %2897 = vmatprep.subr.bf16.mxu0 0
    %2898 = vmatpush1.bf16.msra.mxu0 %v2473
    %2899 = vmatprep.subr.bf16.mxu0 0
    %2900 = vmatpush1.bf16.msra.mxu0 %v2474
    %2901 = vmatprep.subr.bf16.mxu0 0
    %2902 = vmatpush1.bf16.msra.mxu0 %v2475
    %2903 = vmatprep.subr.bf16.mxu0 0
    %2904 = vmatpush1.bf16.msra.mxu0 %v2476
    %2905 = vmatprep.subr.bf16.mxu0 0
    %2906 = vmatpush1.bf16.msra.mxu0 %v2477
    %2907 = vmatprep.subr.bf16.mxu0 0
    %2908 = vmatpush1.bf16.msra.mxu0 %v2478
    %2909 = vmatprep.subr.bf16.mxu0 0
    %2910 = vmatpush1.bf16.msra.mxu0 %v2479
    %2911 = vmatprep.subr.bf16.mxu0 0
    %2912 = vmatpush1.bf16.msra.mxu0 %v2480
    %2913 = vmatprep.subr.bf16.mxu0 0
    %2914 = vmatpush1.bf16.msra.mxu0 %v2481
    %2915 = vmatprep.subr.bf16.mxu0 0
    %2916 = vmatpush1.bf16.msra.mxu0 %v2482
    %2917 = vmatprep.subr.bf16.mxu0 0
    %2918 = vmatpush1.bf16.msra.mxu0 %v2483
    %2919 = vmatprep.subr.bf16.mxu0 0
    %2920 = vmatpush1.bf16.msra.mxu0 %v2484
    %2921 = vmatprep.subr.bf16.mxu0 0
    %2922 = vmatpush1.bf16.msra.mxu0 %v2485
    %2923 = vmatprep.mubr.bf16.mxu0 %v408
    %2924 = vmatmul.mubr.bf16.gmra.mrb[0].mxu0 %v407
    %v2925 = vpop.f32.mrb[0].mxu0
    %v2926 = vadd.f32 %v2877, %v2925
    %v2927 = vpop.f32.mrb[0].mxu0
    %v2928 = vpop.f32.mrb[0].mxu0
    %v2929 = vadd.f32 %v2880, %v2928
    %v2930 = vpop.f32.mrb[0].mxu0
    %2931 = vmatprep.mubr.bf16.mxu0 %v424
    %2932 = vmatmul.mubr.bf16.gmra.mrb[0].mxu0 %v423
    %v2933 = vpop.f32.mrb[0].mxu0
    %v2934 = vadd.f32 %v2885, %v2933
    %v2935 = vpop.f32.mrb[0].mxu0
    %v2936 = vpop.f32.mrb[0].mxu0
    %v2937 = vadd.f32 %v2888, %v2936
    %v2938 = vpop.f32.mrb[0].mxu0
    %2939 = vdwg.mxu0
    %2940 = vmatprep.subr.bf16.mxu0 0
    %2941 = vmatpush1.bf16.msra.mxu0 %v2486
    %2942 = vmatprep.subr.bf16.mxu0 0
    %2943 = vmatpush1.bf16.msra.mxu0 %v2487
    %2944 = vmatprep.subr.bf16.mxu0 0
    %2945 = vmatpush1.bf16.msra.mxu0 %v2488
    %2946 = vmatprep.subr.bf16.mxu0 0
    %2947 = vmatpush1.bf16.msra.mxu0 %v2489
    %2948 = vmatprep.subr.bf16.mxu0 0
    %2949 = vmatpush1.bf16.msra.mxu0 %v2490
    %2950 = vmatprep.subr.bf16.mxu0 0
    %2951 = vmatpush1.bf16.msra.mxu0 %v2491
    %2952 = vmatprep.subr.bf16.mxu0 0
    %2953 = vmatpush1.bf16.msra.mxu0 %v2492
    %2954 = vmatprep.subr.bf16.mxu0 0
    %2955 = vmatpush1.bf16.msra.mxu0 %v2493
    %2956 = vmatprep.subr.bf16.mxu0 0
    %2957 = vmatpush1.bf16.msra.mxu0 %v2494
    %2958 = vmatprep.subr.bf16.mxu0 0
    %2959 = vmatpush1.bf16.msra.mxu0 %v2495
    %2960 = vmatprep.subr.bf16.mxu0 0
    %2961 = vmatpush1.bf16.msra.mxu0 %v2496
    %2962 = vmatprep.subr.bf16.mxu0 0
    %2963 = vmatpush1.bf16.msra.mxu0 %v2497
    %2964 = vmatprep.subr.bf16.mxu0 0
    %2965 = vmatpush1.bf16.msra.mxu0 %v2498
    %2966 = vmatprep.subr.bf16.mxu0 0
    %2967 = vmatpush1.bf16.msra.mxu0 %v2499
    %2968 = vmatprep.subr.bf16.mxu0 0
    %2969 = vmatpush1.bf16.msra.mxu0 %v2500
    %2970 = vmatprep.subr.bf16.mxu0 0
    %2971 = vmatpush1.bf16.msra.mxu0 %v2501
    %2972 = vmatprep.mubr.bf16.mxu0 %v410
    %2973 = vmatmul.mubr.bf16.gmra.mrb[0].mxu0 %v409
    %v2974 = vpop.f32.mrb[0].mxu0
    %v2975 = vadd.f32 %v2926, %v2974
    %v2976 = vpop.f32.mrb[0].mxu0
    %v2977 = vpop.f32.mrb[0].mxu0
    %v2978 = vadd.f32 %v2929, %v2977
    %v2979 = vpop.f32.mrb[0].mxu0
    %2980 = vmatprep.mubr.bf16.mxu0 %v426
    %2981 = vmatmul.mubr.bf16.gmra.mrb[0].mxu0 %v425
    %v2982 = vpop.f32.mrb[0].mxu0
    %v2983 = vadd.f32 %v2934, %v2982
    %v2984 = vpop.f32.mrb[0].mxu0
    %v2985 = vpop.f32.mrb[0].mxu0
    %v2986 = vadd.f32 %v2937, %v2985
    %v2987 = vpop.f32.mrb[0].mxu0
    %2988 = vdwg.mxu0
    %2989 = vmatprep.subr.bf16.mxu0 0
    %2990 = vmatpush1.bf16.msra.mxu0 %v2502
    %2991 = vmatprep.subr.bf16.mxu0 0
    %2992 = vmatpush1.bf16.msra.mxu0 %v2503
    %2993 = vmatprep.subr.bf16.mxu0 0
    %2994 = vmatpush1.bf16.msra.mxu0 %v2504
    %2995 = vmatprep.subr.bf16.mxu0 0
    %2996 = vmatpush1.bf16.msra.mxu0 %v2505
    %2997 = vmatprep.subr.bf16.mxu0 0
    %2998 = vmatpush1.bf16.msra.mxu0 %v2506
    %2999 = vmatprep.subr.bf16.mxu0 0
    %3000 = vmatpush1.bf16.msra.mxu0 %v2507
    %3001 = vmatprep.subr.bf16.mxu0 0
    %3002 = vmatpush1.bf16.msra.mxu0 %v2508
    %3003 = vmatprep.subr.bf16.mxu0 0
    %3004 = vmatpush1.bf16.msra.mxu0 %v2509
    %3005 = vmatprep.subr.bf16.mxu0 0
    %3006 = vmatpush1.bf16.msra.mxu0 %v2510
    %3007 = vmatprep.subr.bf16.mxu0 0
    %3008 = vmatpush1.bf16.msra.mxu0 %v2511
    %3009 = vmatprep.subr.bf16.mxu0 0
    %3010 = vmatpush1.bf16.msra.mxu0 %v2512
    %3011 = vmatprep.subr.bf16.mxu0 0
    %3012 = vmatpush1.bf16.msra.mxu0 %v2513
    %3013 = vmatprep.subr.bf16.mxu0 0
    %3014 = vmatpush1.bf16.msra.mxu0 %v2514
    %3015 = vmatprep.subr.bf16.mxu0 0
    %3016 = vmatpush1.bf16.msra.mxu0 %v2515
    %3017 = vmatprep.subr.bf16.mxu0 0
    %3018 = vmatpush1.bf16.msra.mxu0 %v2516
    %3019 = vmatprep.subr.bf16.mxu0 0
    %3020 = vmatpush1.bf16.msra.mxu0 %v2517
    %3021 = vmatprep.mubr.bf16.mxu0 %v412
    %3022 = vmatmul.mubr.bf16.gmra.mrb[0].mxu0 %v411
    %v3023 = vpop.f32.mrb[0].mxu0
    %v3024 = vadd.f32 %v2975, %v3023
    %v3025 = vpop.f32.mrb[0].mxu0
    %v3026 = vpop.f32.mrb[0].mxu0
    %v3027 = vadd.f32 %v2978, %v3026
    %v3028 = vpop.f32.mrb[0].mxu0
    %3029 = vmatprep.mubr.bf16.mxu0 %v428
    %3030 = vmatmul.mubr.bf16.gmra.mrb[0].mxu0 %v427
    %v3031 = vpop.f32.mrb[0].mxu0
    %v3032 = vadd.f32 %v2983, %v3031
    %v3033 = vpop.f32.mrb[0].mxu0
    %v3034 = vpop.f32.mrb[0].mxu0
    %v3035 = vadd.f32 %v2986, %v3034
    %v3036 = vpop.f32.mrb[0].mxu0
    %3037 = vdwg.mxu0
    %v3038 = vmax.f32 %v1607, 0.0
    %v3039 = vmax.f32 %v1610, 0.0
    %v3040 = vmax.f32 %v1615, 0.0
    %v3041 = vmax.f32 %v1618, 0.0
    %vm3042 = vcmask 523264
    %3043 = vst.msk [vmem:[#allocation2] sm:$0xff] %vm3042, %v3038
    %3044 = vst.msk [vmem:[#allocation2 + $0x8] sm:$0xff] %vm3042, %v3039
    %3045 = vst.msk [vmem:[#allocation2 + $0x10] sm:$0xff] %vm3042, %v3040
    %3046 = vst.msk [vmem:[#allocation2 + $0x18] sm:$0xff] %vm3042, %v3041
    %v3047 = vmax.f32 %v3024, 0.0
    %v3048 = vmax.f32 %v3027, 0.0
    %v3049 = vmax.f32 %v3032, 0.0
    %v3050 = vmax.f32 %v3035, 0.0
    %s3051 = scalar_lea.vmem [#allocation2], 32
    %3052 = vst.msk [vmem:[%s3051] sm:$0xff] %vm3042, %v3047
    %3053 = vst.msk [vmem:[%s3051 + $0x8] sm:$0xff] %vm3042, %v3048
    %3054 = vst.msk [vmem:[%s3051 + $0x10] sm:$0xff] %vm3042, %v3049
    %3055 = vst.msk [vmem:[%s3051 + $0x18] sm:$0xff] %vm3042, %v3050
    // Predicated region
    $region10: #{tpu_custom_call.1} parent=1 // pred_check
      _
    $region11: #{tpu_custom_call.1} parent=1 // pred_check_branch
      %3057 = sbr.rel (0) target = $region13
    $region12: #{tpu_custom_call.1} parent=1 // pred_region
      %s3059 = ssub.s32 1024, 1024
      %3060 = vsyncadd [#allocation3], %s3059
      %s3061 = sshll.u32 [#allocation2], 4
      %s3062 = int_to_ptr.vmem [resolvable:$true] %s3061
      %3067 = dma.vmem_to_hbm [thread:$0]  %s3062, 1024, %s2, [#allocation3], 128, 128, 8
    $region13: #{tpu_custom_call.1} parent=1 // pred_fallthru
      _
    // Predicated region
    $region14: #{tpu_custom_call.1} parent=1 // pred_check
      _
    $region15: #{tpu_custom_call.1} parent=1 // pred_check_branch
      %3069 = sbr.rel (0) target = $region17
    $region16: #{tpu_custom_call.1} parent=1 // pred_region
      %3070 = dma.done [#allocation3], 1024
    $region17: #{tpu_custom_call.1} parent=1 // pred_fallthru
      _
    %3071 = vsyncpa [#allocation3], 1

</llo_original>
